<compile_context>
chip_gen: v6e
topology: v6e:2x2x1
jax: 0.10.0
libtpu: 0.0.40
codegen_flags: <defaults>
</compile_context>

<pallas_src>
import jax
import jax.numpy as jnp
from jax.experimental import pallas as pl
from jax.experimental.pallas import tpu as pltpu


def _round_up(v, m):
    return ((v + m - 1) // m) * m


def _vgrnn_kernel(
    # per-step streamed input
    a_ref,
    # resident time-invariant inputs
    h0_ref, xp_c1_ref, xp_gate_ref,
    # prior, prior_mean (padded to lane-dense width)
    w_pr_ref, b_pr_ref, w_pm_ref, b_pm_ref,
    # encoder: c1 GCN h-part (h -> h) and mean GCN (h -> z)
    w_c1h_ref, b_c1_ref, w_mean_ref, b_mean_ref,
    # phi_z
    w_phiz_ref, b_phiz_ref,
    # GraphGRU fused gate weights (pz -> [z|r|h_hat_pre], h -> [z|r|0]) and hh GCN
    w_gz_ref, w_gh_ref, b_gate_ref, w_hh_ref, b_hh_ref,
    # outputs
    z_out_ref, h_out_ref,
    # scratch: hidden-state carry
    h_scr,
):
    f32 = jnp.float32
    bf16 = jnp.bfloat16
    t = pl.program_id(0)
    h_dim = h_scr.shape[1]

    @pl.when(t == 0)
    def _init():
        h_scr[...] = h0_ref[...]

    a = a_ref[0]                 # (N, N) bf16 normalized adjacency for step t
    h = h_scr[...]               # (N, h) f32 hidden carry
    h_bf = h.astype(bf16)

    def mm(p, w):
        # bf16 MXU inputs, f32 accumulation.
        return jnp.dot(p.astype(bf16), w, preferred_element_type=f32)

    # ---- prior branch (prior_std computed but unused in torch eval path) --------
    pr = jnp.maximum(mm(h_bf, w_pr_ref[...]) + b_pr_ref[...], 0.0)           # (N, h)
    prior_mean = mm(pr, w_pm_ref[...]) + b_pm_ref[...]                       # (N, Z_PAD)

    # ---- encoder (VGAE_Prior): c1 GCN + ReLU, then mean GCN ---------------------
    # xp @ W_c1x is time-invariant (static node features) and precomputed.
    c1_pre = xp_c1_ref[...] + mm(h_bf, w_c1h_ref[...])                       # (N, h)
    enc_h = jnp.maximum(mm(a, c1_pre) + b_c1_ref[...], 0.0)                  # hop1
    # Dropout(0.25) -> identity (eval mode).
    z_enc = mm(a, mm(enc_h, w_mean_ref[...])) + b_mean_ref[...]              # hop2

    # ---- phi_z: Linear + ReLU ----------------------------------------------------
    pz = jnp.maximum(mm(z_enc, w_phiz_ref[...]) + b_phiz_ref[...], 0.0)      # (N, h)

    # ---- GraphGRU.forward_once (single layer), gates fused -----------------------
    # pre-propagation features for z, r gates (x*+h* combined; same A) and the xh
    # part of h_hat; xp @ W_gx is time-invariant and precomputed.
    gate_pre = xp_gate_ref[...] + mm(pz, w_gz_ref[...]) + mm(h_bf, w_gh_ref[...])
    hop3 = mm(a, gate_pre) + b_gate_ref[...]                                 # (N, 3h)

    z_g = jax.nn.sigmoid(hop3[:, :h_dim])
    r_g = jax.nn.sigmoid(hop3[:, h_dim:2 * h_dim])
    pre_hh = hop3[:, 2 * h_dim:]

    hop4 = mm(a, mm(r_g * h, w_hh_ref[...])) + b_hh_ref[...]                 # (N, h)
    h_hat = jnp.tanh(pre_hh + hop4)

    # Reproduces the torch quirk `h_out = z_g * h[i] + ...` with i == 0:
    # h[0] is the first ROW of h, broadcast across all nodes.
    h_row0 = h[0:1, :]
    h_new = z_g * h_row0 + (1.0 - z_g) * h_hat
    # GraphGRU Dropout(0.25) -> identity (eval mode).

    h_scr[...] = h_new
    z_out_ref[0] = prior_mean        # eval + pred=True: returned z is prior_mean

    @pl.when(t == pl.num_programs(0) - 1)
    def _final():
        h_out_ref[...] = h_new


def _const_spec(arr):
    nd = arr.ndim
    return pl.BlockSpec(arr.shape, lambda t, _nd=nd: (0,) * _nd)


def vgrnn_forward(xs, adjs, params, h0=None):
    """VGRNN.forward: static node features xs (dynamic_feats=False), one dense
    symmetrically-normalized adjacency per timestep.  Returns (stack(zs), h, kld)."""
    T, N = int(adjs.shape[0]), int(adjs.shape[1])
    h_dim = int(params["w_phix"].shape[1])
    z_dim = int(params["w_mean"].shape[1])
    z_pad = _round_up(max(z_dim, 128), 128)        # lane-dense z output slab

    bf16 = jnp.bfloat16
    f32 = jnp.float32

    if h0 is None:
        h0 = jnp.zeros((N, h_dim), f32)

    a_bf = adjs.astype(bf16)

    # ---- weight packing / fusion + time-invariant hoisting (once, in wrapper) ---
    w_pm_pad = jnp.zeros((h_dim, z_pad), f32).at[:, :z_dim].set(params["w_pm"]).astype(bf16)
    b_pm_pad = jnp.zeros((1, z_pad), f32).at[:, :z_dim].set(params["b_pm"])

    # phi_x(x) is constant over time (dynamic_feats=False): hoist it and its
    # projections out of the per-step kernel.
    xp = jax.nn.relu(
        jnp.dot(xs.astype(bf16), params["w_phix"].astype(bf16),
                preferred_element_type=f32) + params["b_phix"])
    xp_bf = xp.astype(bf16)
    xp_c1 = jnp.dot(xp_bf, params["w_c1x"].astype(bf16),
                    preferred_element_type=f32)                                 # (N, h)

    w_gx = jnp.concatenate(
        [params["w_xz_a"], params["w_xr_a"], params["w_xh_a"]], axis=1).astype(bf16)
    xp_gate = jnp.dot(xp_bf, w_gx, preferred_element_type=f32)                  # (N, 3h)

    w_gz = jnp.concatenate(
        [params["w_xz_b"], params["w_xr_b"], params["w_xh_b"]], axis=1).astype(bf16)
    zeros_hh = jnp.zeros((h_dim, h_dim), f32)
    w_gh = jnp.concatenate(
        [params["w_hz"], params["w_hr"], zeros_hh], axis=1).astype(bf16)        # (h, 3h)
    b_gate = jnp.concatenate(
        [params["b_xz"] + params["b_hz"],
         params["b_xr"] + params["b_hr"],
         params["b_xh"]], axis=1)                                               # (1, 3h)

    args = (
        a_bf, h0, xp_c1, xp_gate,
        params["w_pr"].astype(bf16), params["b_pr"],
        w_pm_pad, b_pm_pad,
        params["w_c1h"].astype(bf16), params["b_c1"],
        params["w_mean"].astype(bf16), params["b_mean"],
        params["w_phiz"].astype(bf16), params["b_phiz"],
        w_gz, w_gh, b_gate,
        params["w_hh"].astype(bf16), params["b_hh"],
    )

    in_specs = [pl.BlockSpec((1, N, N), lambda t: (t, 0, 0))]
    in_specs += [_const_spec(a) for a in args[1:]]

    out_specs = (
        pl.BlockSpec((1, N, z_pad), lambda t: (t, 0, 0)),
        pl.BlockSpec((N, h_dim), lambda t: (0, 0)),
    )
    out_shape = (
        jax.ShapeDtypeStruct((T, N, z_pad), f32),
        jax.ShapeDtypeStruct((N, h_dim), f32),
    )

    # ---- explicit VMEM budget (double-buffered streamed blocks + resident set) --
    per_step_a = N * N * 2                                                     # bf16 block
    resident_in = sum(int(a.size) * a.dtype.itemsize for a in args[1:])
    out_bytes = N * z_pad * 4 + N * h_dim * 4
    scratch_bytes = N * h_dim * 4
    working = 2 * per_step_a + 2 * resident_in + 2 * out_bytes + scratch_bytes
    vmem_limit = int(min(max(2 * working + (8 << 20), 16 << 20), 64 << 20))

    grid_spec = pltpu.PrefetchScalarGridSpec(
        num_scalar_prefetch=0,
        grid=(T,),
        in_specs=in_specs,
        out_specs=out_specs,
        scratch_shapes=[pltpu.VMEM((N, h_dim), f32)],
    )

    z_slab, h_out = pl.pallas_call(
        _vgrnn_kernel,
        grid_spec=grid_spec,
        out_shape=out_shape,
        compiler_params=pltpu.CompilerParams(
            dimension_semantics=("arbitrary",),
            vmem_limit_bytes=vmem_limit,
        ),
    )(*args)

    zs = z_slab[:, :, :z_dim]
    # Encoder always takes the `if self.eval:` branch in the torch code, so the
    # accumulated KLD stays zero.
    kld = jnp.zeros((1,), jnp.float32)
    return zs, h_out, kld


# ----------------------------- glue / setup --------------------------------------

def init_params(key, x_dim, h_dim, z_dim):
    keys = iter(jax.random.split(key, 24))

    def lin(in_d, out_d):
        w = jax.random.normal(next(keys), (in_d, out_d), jnp.float32) / jnp.sqrt(
            jnp.float32(in_d))
        b = 0.01 * jax.random.normal(next(keys), (1, out_d), jnp.float32)
        return w, b

    p = {}
    p["w_phix"], p["b_phix"] = lin(x_dim, h_dim)            # phi_x
    p["w_pr"], p["b_pr"] = lin(h_dim, h_dim)                 # prior
    p["w_pm"], p["b_pm"] = lin(h_dim, z_dim)                 # prior_mean
    w_c1, p["b_c1"] = lin(2 * h_dim, h_dim)                  # encoder.c1 (GCN 2h->h)
    p["w_c1x"], p["w_c1h"] = w_c1[:h_dim], w_c1[h_dim:]
    p["w_mean"], p["b_mean"] = lin(h_dim, z_dim)             # encoder.mean (GCN h->z)
    p["w_phiz"], p["b_phiz"] = lin(z_dim, h_dim)             # phi_z
    for g in ("xz", "xr", "xh"):                             # GraphGRU GCN(2h->h)
        w, b = lin(2 * h_dim, h_dim)
        p[f"w_{g}_a"], p[f"w_{g}_b"], p[f"b_{g}"] = w[:h_dim], w[h_dim:], b
    for g in ("hz", "hr", "hh"):                             # GraphGRU GCN(h->h)
        p[f"w_{g}"], p[f"b_{g}"] = lin(h_dim, h_dim)
    return p


def make_norm_adj(key, n, p_edge=0.3):
    """Dense symmetrically normalized adjacency with self loops (PyG gcn_norm)."""
    m = jax.random.bernoulli(key, p_edge, (n, n)).astype(jnp.float32)
    m = jnp.triu(m, 1)
    m = m + m.T                                  # undirected, no self loops in edge list
    a_hat = m + jnp.eye(n, dtype=jnp.float32)    # add_self_loops
    deg = a_hat.sum(axis=1)
    dinv = 1.0 / jnp.sqrt(deg)
    return a_hat * dinv[:, None] * dinv[None, :]


if __name__ == "__main__":
    key = jax.random.PRNGKey(0)
    N, X_DIM, H_DIM, Z_DIM, T = 64, 16, 32, 16, 4
    k_p, k_x, k_a = jax.random.split(key, 3)

    params = init_params(k_p, X_DIM, H_DIM, Z_DIM)
    xs = jax.random.normal(k_x, (N, X_DIM), jnp.float32)            # static node feats
    adjs = jnp.stack([make_norm_adj(k, N) for k in jax.random.split(k_a, T)])

    zs, h, kld = vgrnn_forward(xs, adjs, params)
    jax.block_until_ready((zs, h, kld))

    assert zs.shape == (T, N, Z_DIM) and h.shape == (N, H_DIM) and kld.shape == (1,)
    assert bool(jnp.all(jnp.isfinite(zs))) and bool(jnp.all(jnp.isfinite(h)))
    print("KERNEL_OK")
</pallas_src>

<mosaic_0001>
module attributes {stable_mosaic.version = 11 : i64} {
  func.func @_vgrnn_kernel(%arg0: i32, %arg1: memref<1x64x64xbf16, #tpu.memory_space<vmem>>, %arg2: memref<64x32xf32, #tpu.memory_space<vmem>>, %arg3: memref<64x32xf32, #tpu.memory_space<vmem>>, %arg4: memref<64x96xf32, #tpu.memory_space<vmem>>, %arg5: memref<32x32xbf16, #tpu.memory_space<vmem>>, %arg6: memref<1x32xf32, #tpu.memory_space<vmem>>, %arg7: memref<32x128xbf16, #tpu.memory_space<vmem>>, %arg8: memref<1x128xf32, #tpu.memory_space<vmem>>, %arg9: memref<32x32xbf16, #tpu.memory_space<vmem>>, %arg10: memref<1x32xf32, #tpu.memory_space<vmem>>, %arg11: memref<32x16xbf16, #tpu.memory_space<vmem>>, %arg12: memref<1x16xf32, #tpu.memory_space<vmem>>, %arg13: memref<16x32xbf16, #tpu.memory_space<vmem>>, %arg14: memref<1x32xf32, #tpu.memory_space<vmem>>, %arg15: memref<32x96xbf16, #tpu.memory_space<vmem>>, %arg16: memref<32x96xbf16, #tpu.memory_space<vmem>>, %arg17: memref<1x96xf32, #tpu.memory_space<vmem>>, %arg18: memref<32x32xbf16, #tpu.memory_space<vmem>>, %arg19: memref<1x32xf32, #tpu.memory_space<vmem>>, %arg20: memref<1x64x128xf32, #tpu.memory_space<vmem>>, %arg21: memref<64x32xf32, #tpu.memory_space<vmem>>, %arg22: memref<64x32xf32, #tpu.memory_space<vmem>>) attributes {dimension_semantics = [#tpu.dimension_semantics<arbitrary>], iteration_bounds = array<i64: 4>, scalar_prefetch = 0 : i64, scratch_operands = 1 : i64, tpu.core_type = #tpu.core_type<tc>, window_params = [{transform_indices = @transform_0, window_bounds = array<i64: 1, 64, 64>}, {pipeline_mode = #tpu.pipeline_mode<synchronous>, transform_indices = @transform_1, window_bounds = array<i64: 64, 32>}, {pipeline_mode = #tpu.pipeline_mode<synchronous>, transform_indices = @transform_2, window_bounds = array<i64: 64, 32>}, {pipeline_mode = #tpu.pipeline_mode<synchronous>, transform_indices = @transform_3, window_bounds = array<i64: 64, 96>}, {pipeline_mode = #tpu.pipeline_mode<synchronous>, transform_indices = @transform_4, window_bounds = array<i64: 32, 32>}, {pipeline_mode = #tpu.pipeline_mode<synchronous>, transform_indices = @transform_5, window_bounds = array<i64: 1, 32>}, {pipeline_mode = #tpu.pipeline_mode<synchronous>, transform_indices = @transform_6, window_bounds = array<i64: 32, 128>}, {pipeline_mode = #tpu.pipeline_mode<synchronous>, transform_indices = @transform_7, window_bounds = array<i64: 1, 128>}, {pipeline_mode = #tpu.pipeline_mode<synchronous>, transform_indices = @transform_8, window_bounds = array<i64: 32, 32>}, {pipeline_mode = #tpu.pipeline_mode<synchronous>, transform_indices = @transform_9, window_bounds = array<i64: 1, 32>}, {pipeline_mode = #tpu.pipeline_mode<synchronous>, transform_indices = @transform_10, window_bounds = array<i64: 32, 16>}, {pipeline_mode = #tpu.pipeline_mode<synchronous>, transform_indices = @transform_11, window_bounds = array<i64: 1, 16>}, {pipeline_mode = #tpu.pipeline_mode<synchronous>, transform_indices = @transform_12, window_bounds = array<i64: 16, 32>}, {pipeline_mode = #tpu.pipeline_mode<synchronous>, transform_indices = @transform_13, window_bounds = array<i64: 1, 32>}, {pipeline_mode = #tpu.pipeline_mode<synchronous>, transform_indices = @transform_14, window_bounds = array<i64: 32, 96>}, {pipeline_mode = #tpu.pipeline_mode<synchronous>, transform_indices = @transform_15, window_bounds = array<i64: 32, 96>}, {pipeline_mode = #tpu.pipeline_mode<synchronous>, transform_indices = @transform_16, window_bounds = array<i64: 1, 96>}, {pipeline_mode = #tpu.pipeline_mode<synchronous>, transform_indices = @transform_17, window_bounds = array<i64: 32, 32>}, {pipeline_mode = #tpu.pipeline_mode<synchronous>, transform_indices = @transform_18, window_bounds = array<i64: 1, 32>}, {transform_indices = @transform_19, window_bounds = array<i64: 1, 64, 128>}, {pipeline_mode = #tpu.pipeline_mode<synchronous>, transform_indices = @transform_20, window_bounds = array<i64: 64, 32>}]} {
    %c0_i32 = arith.constant 0 : i32
    %0 = arith.cmpi eq, %arg0, %c0_i32 : i32
    %1 = arith.extui %0 : i1 to i32
    %c0_i32_0 = arith.constant 0 : i32
    %2 = arith.cmpi ne, %1, %c0_i32_0 : i32
    scf.if %2 {
      %c0_62 = arith.constant 0 : index
      %c0_63 = arith.constant 0 : index
      %94 = vector.load %arg2[%c0_62, %c0_63] : memref<64x32xf32, #tpu.memory_space<vmem>>, vector<64x32xf32>
      %c0_64 = arith.constant 0 : index
      %c0_65 = arith.constant 0 : index
      %95 = vector.load %arg22[%c0_64, %c0_65] : memref<64x32xf32, #tpu.memory_space<vmem>>, vector<64x32xf32>
      tpu.vector_store %arg22[%c0_64, %c0_65], %94 {strides = array<i32>} : memref<64x32xf32, #tpu.memory_space<vmem>>, vector<64x32xf32>,
    } else {
    }
    %c0 = arith.constant 0 : index
    %c0_1 = arith.constant 0 : index
    %c0_2 = arith.constant 0 : index
    %3 = vector.load %arg1[%c0, %c0_1, %c0_2] : memref<1x64x64xbf16, #tpu.memory_space<vmem>>, vector<1x64x64xbf16>
    %4 = vector.shape_cast %3 : vector<1x64x64xbf16> to vector<64x64xbf16>
    %c0_3 = arith.constant 0 : index
    %c0_4 = arith.constant 0 : index
    %5 = vector.load %arg22[%c0_3, %c0_4] : memref<64x32xf32, #tpu.memory_space<vmem>>, vector<64x32xf32>
    %6 = arith.truncf %5 : vector<64x32xf32> to vector<64x32xbf16>
    %c0_5 = arith.constant 0 : index
    %c0_6 = arith.constant 0 : index
    %7 = vector.load %arg5[%c0_5, %c0_6] : memref<32x32xbf16, #tpu.memory_space<vmem>>, vector<32x32xbf16>
    %cst = arith.constant dense<0.000000e+00> : vector<64x32xf32>
    %8 = tpu.matmul %6, %7, %cst {dimension_numbers = #tpu.dot_dimension_numbers<[1], [0], [0], [1], [0, 0, 1, 1], [], []>} : vector<64x32xbf16>, vector<32x32xbf16>, vector<64x32xf32> -> vector<64x32xf32>
    %c0_7 = arith.constant 0 : index
    %c0_8 = arith.constant 0 : index
    %9 = vector.load %arg6[%c0_7, %c0_8] : memref<1x32xf32, #tpu.memory_space<vmem>>, vector<1x32xf32>
    %10 = vector.broadcast %9 : vector<1x32xf32> to vector<64x32xf32>
    %11 = arith.addf %8, %10 : vector<64x32xf32>
    %cst_9 = arith.constant 0.000000e+00 : f32
    %12 = vector.broadcast %cst_9 : f32 to vector<64x32xf32>
    %13 = arith.maximumf %11, %12 : vector<64x32xf32>
    %c0_10 = arith.constant 0 : index
    %c0_11 = arith.constant 0 : index
    %14 = vector.load %arg7[%c0_10, %c0_11] : memref<32x128xbf16, #tpu.memory_space<vmem>>, vector<32x128xbf16>
    %15 = arith.truncf %13 : vector<64x32xf32> to vector<64x32xbf16>
    %cst_12 = arith.constant dense<0.000000e+00> : vector<64x128xf32>
    %16 = tpu.matmul %15, %14, %cst_12 {dimension_numbers = #tpu.dot_dimension_numbers<[1], [0], [0], [1], [0, 0, 1, 1], [], []>} : vector<64x32xbf16>, vector<32x128xbf16>, vector<64x128xf32> -> vector<64x128xf32>
    %c0_13 = arith.constant 0 : index
    %c0_14 = arith.constant 0 : index
    %17 = vector.load %arg8[%c0_13, %c0_14] : memref<1x128xf32, #tpu.memory_space<vmem>>, vector<1x128xf32>
    %18 = vector.broadcast %17 : vector<1x128xf32> to vector<64x128xf32>
    %19 = arith.addf %16, %18 : vector<64x128xf32>
    %c0_15 = arith.constant 0 : index
    %c0_16 = arith.constant 0 : index
    %20 = vector.load %arg3[%c0_15, %c0_16] : memref<64x32xf32, #tpu.memory_space<vmem>>, vector<64x32xf32>
    %c0_17 = arith.constant 0 : index
    %c0_18 = arith.constant 0 : index
    %21 = vector.load %arg9[%c0_17, %c0_18] : memref<32x32xbf16, #tpu.memory_space<vmem>>, vector<32x32xbf16>
    %cst_19 = arith.constant dense<0.000000e+00> : vector<64x32xf32>
    %22 = tpu.matmul %6, %21, %cst_19 {dimension_numbers = #tpu.dot_dimension_numbers<[1], [0], [0], [1], [0, 0, 1, 1], [], []>} : vector<64x32xbf16>, vector<32x32xbf16>, vector<64x32xf32> -> vector<64x32xf32>
    %23 = arith.addf %20, %22 : vector<64x32xf32>
    %cst_20 = arith.constant dense<0.000000e+00> : vector<64x32xf32>
    %24 = tpu.matmul %4, %23, %cst_20 {dimension_numbers = #tpu.dot_dimension_numbers<[1], [0], [0], [1], [0, 0, 1, 1], [], []>} : vector<64x64xbf16>, vector<64x32xf32>, vector<64x32xf32> -> vector<64x32xf32>
    %c0_21 = arith.constant 0 : index
    %c0_22 = arith.constant 0 : index
    %25 = vector.load %arg10[%c0_21, %c0_22] : memref<1x32xf32, #tpu.memory_space<vmem>>, vector<1x32xf32>
    %26 = vector.broadcast %25 : vector<1x32xf32> to vector<64x32xf32>
    %27 = arith.addf %24, %26 : vector<64x32xf32>
    %cst_23 = arith.constant 0.000000e+00 : f32
    %28 = vector.broadcast %cst_23 : f32 to vector<64x32xf32>
    %29 = arith.maximumf %27, %28 : vector<64x32xf32>
    %c0_24 = arith.constant 0 : index
    %c0_25 = arith.constant 0 : index
    %30 = vector.load %arg11[%c0_24, %c0_25] : memref<32x16xbf16, #tpu.memory_space<vmem>>, vector<32x16xbf16>
    %31 = arith.truncf %29 : vector<64x32xf32> to vector<64x32xbf16>
    %cst_26 = arith.constant dense<0.000000e+00> : vector<64x16xf32>
    %32 = tpu.matmul %31, %30, %cst_26 {dimension_numbers = #tpu.dot_dimension_numbers<[1], [0], [0], [1], [0, 0, 1, 1], [], []>} : vector<64x32xbf16>, vector<32x16xbf16>, vector<64x16xf32> -> vector<64x16xf32>
    %cst_27 = arith.constant dense<0.000000e+00> : vector<64x16xf32>
    %33 = tpu.matmul %4, %32, %cst_27 {dimension_numbers = #tpu.dot_dimension_numbers<[1], [0], [0], [1], [0, 0, 1, 1], [], []>} : vector<64x64xbf16>, vector<64x16xf32>, vector<64x16xf32> -> vector<64x16xf32>
    %c0_28 = arith.constant 0 : index
    %c0_29 = arith.constant 0 : index
    %34 = vector.load %arg12[%c0_28, %c0_29] : memref<1x16xf32, #tpu.memory_space<vmem>>, vector<1x16xf32>
    %35 = vector.broadcast %34 : vector<1x16xf32> to vector<64x16xf32>
    %36 = arith.addf %33, %35 : vector<64x16xf32>
    %c0_30 = arith.constant 0 : index
    %c0_31 = arith.constant 0 : index
    %37 = vector.load %arg13[%c0_30, %c0_31] : memref<16x32xbf16, #tpu.memory_space<vmem>>, vector<16x32xbf16>
    %38 = arith.truncf %36 : vector<64x16xf32> to vector<64x16xbf16>
    %cst_32 = arith.constant dense<0.000000e+00> : vector<64x32xf32>
    %39 = tpu.matmul %38, %37, %cst_32 {dimension_numbers = #tpu.dot_dimension_numbers<[1], [0], [0], [1], [0, 0, 1, 1], [], []>} : vector<64x16xbf16>, vector<16x32xbf16>, vector<64x32xf32> -> vector<64x32xf32>
    %c0_33 = arith.constant 0 : index
    %c0_34 = arith.constant 0 : index
    %40 = vector.load %arg14[%c0_33, %c0_34] : memref<1x32xf32, #tpu.memory_space<vmem>>, vector<1x32xf32>
    %41 = vector.broadcast %40 : vector<1x32xf32> to vector<64x32xf32>
    %42 = arith.addf %39, %41 : vector<64x32xf32>
    %cst_35 = arith.constant 0.000000e+00 : f32
    %43 = vector.broadcast %cst_35 : f32 to vector<64x32xf32>
    %44 = arith.maximumf %42, %43 : vector<64x32xf32>
    %c0_36 = arith.constant 0 : index
    %c0_37 = arith.constant 0 : index
    %45 = vector.load %arg4[%c0_36, %c0_37] : memref<64x96xf32, #tpu.memory_space<vmem>>, vector<64x96xf32>
    %c0_38 = arith.constant 0 : index
    %c0_39 = arith.constant 0 : index
    %46 = vector.load %arg15[%c0_38, %c0_39] : memref<32x96xbf16, #tpu.memory_space<vmem>>, vector<32x96xbf16>
    %47 = arith.truncf %44 : vector<64x32xf32> to vector<64x32xbf16>
    %cst_40 = arith.constant dense<0.000000e+00> : vector<64x96xf32>
    %48 = tpu.matmul %47, %46, %cst_40 {dimension_numbers = #tpu.dot_dimension_numbers<[1], [0], [0], [1], [0, 0, 1, 1], [], []>} : vector<64x32xbf16>, vector<32x96xbf16>, vector<64x96xf32> -> vector<64x96xf32>
    %49 = arith.addf %45, %48 : vector<64x96xf32>
    %c0_41 = arith.constant 0 : index
    %c0_42 = arith.constant 0 : index
    %50 = vector.load %arg16[%c0_41, %c0_42] : memref<32x96xbf16, #tpu.memory_space<vmem>>, vector<32x96xbf16>
    %cst_43 = arith.constant dense<0.000000e+00> : vector<64x96xf32>
    %51 = tpu.matmul %6, %50, %cst_43 {dimension_numbers = #tpu.dot_dimension_numbers<[1], [0], [0], [1], [0, 0, 1, 1], [], []>} : vector<64x32xbf16>, vector<32x96xbf16>, vector<64x96xf32> -> vector<64x96xf32>
    %52 = arith.addf %49, %51 : vector<64x96xf32>
    %cst_44 = arith.constant dense<0.000000e+00> : vector<64x96xf32>
    %53 = tpu.matmul %4, %52, %cst_44 {dimension_numbers = #tpu.dot_dimension_numbers<[1], [0], [0], [1], [0, 0, 1, 1], [], []>} : vector<64x64xbf16>, vector<64x96xf32>, vector<64x96xf32> -> vector<64x96xf32>
    %c0_45 = arith.constant 0 : index
    %c0_46 = arith.constant 0 : index
    %54 = vector.load %arg17[%c0_45, %c0_46] : memref<1x96xf32, #tpu.memory_space<vmem>>, vector<1x96xf32>
    %55 = vector.broadcast %54 : vector<1x96xf32> to vector<64x96xf32>
    %56 = arith.addf %53, %55 : vector<64x96xf32>
    %57 = vector.extract_strided_slice %56 {offsets = [0, 0], sizes = [64, 32], strides = [1, 1]} : vector<64x96xf32> to vector<64x32xf32>
    %58 = arith.negf %57 : vector<64x32xf32>
    %59 = math.exp %58 : vector<64x32xf32>
    %cst_47 = arith.constant 1.000000e+00 : f32
    %60 = vector.broadcast %cst_47 : f32 to vector<64x32xf32>
    %61 = arith.addf %60, %59 : vector<64x32xf32>
    %62 = arith.divf %60, %61 : vector<64x32xf32>
    %63 = vector.extract_strided_slice %56 {offsets = [0, 32], sizes = [64, 32], strides = [1, 1]} : vector<64x96xf32> to vector<64x32xf32>
    %64 = arith.negf %63 : vector<64x32xf32>
    %65 = math.exp %64 : vector<64x32xf32>
    %cst_48 = arith.constant 1.000000e+00 : f32
    %66 = vector.broadcast %cst_48 : f32 to vector<64x32xf32>
    %67 = arith.addf %66, %65 : vector<64x32xf32>
    %68 = arith.divf %66, %67 : vector<64x32xf32>
    %69 = vector.extract_strided_slice %56 {offsets = [0, 64], sizes = [64, 32], strides = [1, 1]} : vector<64x96xf32> to vector<64x32xf32>
    %70 = arith.mulf %68, %5 : vector<64x32xf32>
    %c0_49 = arith.constant 0 : index
    %c0_50 = arith.constant 0 : index
    %71 = vector.load %arg18[%c0_49, %c0_50] : memref<32x32xbf16, #tpu.memory_space<vmem>>, vector<32x32xbf16>
    %72 = arith.truncf %70 : vector<64x32xf32> to vector<64x32xbf16>
    %cst_51 = arith.constant dense<0.000000e+00> : vector<64x32xf32>
    %73 = tpu.matmul %72, %71, %cst_51 {dimension_numbers = #tpu.dot_dimension_numbers<[1], [0], [0], [1], [0, 0, 1, 1], [], []>} : vector<64x32xbf16>, vector<32x32xbf16>, vector<64x32xf32> -> vector<64x32xf32>
    %cst_52 = arith.constant dense<0.000000e+00> : vector<64x32xf32>
    %74 = tpu.matmul %4, %73, %cst_52 {dimension_numbers = #tpu.dot_dimension_numbers<[1], [0], [0], [1], [0, 0, 1, 1], [], []>} : vector<64x64xbf16>, vector<64x32xf32>, vector<64x32xf32> -> vector<64x32xf32>
    %c0_53 = arith.constant 0 : index
    %c0_54 = arith.constant 0 : index
    %75 = vector.load %arg19[%c0_53, %c0_54] : memref<1x32xf32, #tpu.memory_space<vmem>>, vector<1x32xf32>
    %76 = vector.broadcast %75 : vector<1x32xf32> to vector<64x32xf32>
    %77 = arith.addf %74, %76 : vector<64x32xf32>
    %78 = arith.addf %69, %77 : vector<64x32xf32>
    %79 = math.tanh %78 : vector<64x32xf32>
    %80 = vector.extract_strided_slice %5 {offsets = [0, 0], sizes = [1, 32], strides = [1, 1]} : vector<64x32xf32> to vector<1x32xf32>
    %81 = vector.broadcast %80 : vector<1x32xf32> to vector<64x32xf32>
    %82 = arith.mulf %62, %81 : vector<64x32xf32>
    %cst_55 = arith.constant 1.000000e+00 : f32
    %83 = vector.broadcast %cst_55 : f32 to vector<64x32xf32>
    %84 = arith.subf %83, %62 : vector<64x32xf32>
    %85 = arith.mulf %84, %79 : vector<64x32xf32>
    %86 = arith.addf %82, %85 : vector<64x32xf32>
    %c0_56 = arith.constant 0 : index
    %c0_57 = arith.constant 0 : index
    %87 = vector.load %arg22[%c0_56, %c0_57] : memref<64x32xf32, #tpu.memory_space<vmem>>, vector<64x32xf32>
    tpu.vector_store %arg22[%c0_56, %c0_57], %86 {strides = array<i32>} : memref<64x32xf32, #tpu.memory_space<vmem>>, vector<64x32xf32>,
    %c0_58 = arith.constant 0 : index
    %c0_59 = arith.constant 0 : index
    %c0_60 = arith.constant 0 : index
    %88 = vector.load %arg20[%c0_58, %c0_59, %c0_60] : memref<1x64x128xf32, #tpu.memory_space<vmem>>, vector<1x64x128xf32>
    %89 = vector.shape_cast %88 : vector<1x64x128xf32> to vector<64x128xf32>
    %90 = vector.shape_cast %19 : vector<64x128xf32> to vector<1x64x128xf32>
    tpu.vector_store %arg20[%c0_58, %c0_59, %c0_60], %90 {strides = array<i32>} : memref<1x64x128xf32, #tpu.memory_space<vmem>>, vector<1x64x128xf32>,
    %c3_i32 = arith.constant 3 : i32
    %91 = arith.cmpi eq, %arg0, %c3_i32 : i32
    %92 = arith.extui %91 : i1 to i32
    %c0_i32_61 = arith.constant 0 : i32
    %93 = arith.cmpi ne, %92, %c0_i32_61 : i32
    scf.if %93 {
      %c0_62 = arith.constant 0 : index
      %c0_63 = arith.constant 0 : index
      %94 = vector.load %arg21[%c0_62, %c0_63] : memref<64x32xf32, #tpu.memory_space<vmem>>, vector<64x32xf32>
      tpu.vector_store %arg21[%c0_62, %c0_63], %86 {strides = array<i32>} : memref<64x32xf32, #tpu.memory_space<vmem>>, vector<64x32xf32>,
    } else {
    }
    return
  }
  func.func @transform_0(%arg0: i32) -> (i32, i32, i32) {
    %c0_i32 = arith.constant 0 : i32
    %c0_i32_0 = arith.constant 0 : i32
    %c0_i32_1 = arith.constant 0 : i32
    return %arg0, %c0_i32, %c0_i32_0 : i32, i32, i32
  }
  func.func @transform_1(%arg0: i32) -> (i32, i32) {
    %c0_i32 = arith.constant 0 : i32
    %c0_i32_0 = arith.constant 0 : i32
    %c0_i32_1 = arith.constant 0 : i32
    return %c0_i32, %c0_i32_0 : i32, i32
  }
  func.func @transform_2(%arg0: i32) -> (i32, i32) {
    %c0_i32 = arith.constant 0 : i32
    %c0_i32_0 = arith.constant 0 : i32
    %c0_i32_1 = arith.constant 0 : i32
    return %c0_i32, %c0_i32_0 : i32, i32
  }
  func.func @transform_3(%arg0: i32) -> (i32, i32) {
    %c0_i32 = arith.constant 0 : i32
    %c0_i32_0 = arith.constant 0 : i32
    %c0_i32_1 = arith.constant 0 : i32
    return %c0_i32, %c0_i32_0 : i32, i32
  }
  func.func @transform_4(%arg0: i32) -> (i32, i32) {
    %c0_i32 = arith.constant 0 : i32
    %c0_i32_0 = arith.constant 0 : i32
    %c0_i32_1 = arith.constant 0 : i32
    return %c0_i32, %c0_i32_0 : i32, i32
  }
  func.func @transform_5(%arg0: i32) -> (i32, i32) {
    %c0_i32 = arith.constant 0 : i32
    %c0_i32_0 = arith.constant 0 : i32
    %c0_i32_1 = arith.constant 0 : i32
    return %c0_i32, %c0_i32_0 : i32, i32
  }
  func.func @transform_6(%arg0: i32) -> (i32, i32) {
    %c0_i32 = arith.constant 0 : i32
    %c0_i32_0 = arith.constant 0 : i32
    %c0_i32_1 = arith.constant 0 : i32
    return %c0_i32, %c0_i32_0 : i32, i32
  }
  func.func @transform_7(%arg0: i32) -> (i32, i32) {
    %c0_i32 = arith.constant 0 : i32
    %c0_i32_0 = arith.constant 0 : i32
    %c0_i32_1 = arith.constant 0 : i32
    return %c0_i32, %c0_i32_0 : i32, i32
  }
  func.func @transform_8(%arg0: i32) -> (i32, i32) {
    %c0_i32 = arith.constant 0 : i32
    %c0_i32_0 = arith.constant 0 : i32
    %c0_i32_1 = arith.constant 0 : i32
    return %c0_i32, %c0_i32_0 : i32, i32
  }
  func.func @transform_9(%arg0: i32) -> (i32, i32) {
    %c0_i32 = arith.constant 0 : i32
    %c0_i32_0 = arith.constant 0 : i32
    %c0_i32_1 = arith.constant 0 : i32
    return %c0_i32, %c0_i32_0 : i32, i32
  }
  func.func @transform_10(%arg0: i32) -> (i32, i32) {
    %c0_i32 = arith.constant 0 : i32
    %c0_i32_0 = arith.constant 0 : i32
    %c0_i32_1 = arith.constant 0 : i32
    return %c0_i32, %c0_i32_0 : i32, i32
  }
  func.func @transform_11(%arg0: i32) -> (i32, i32) {
    %c0_i32 = arith.constant 0 : i32
    %c0_i32_0 = arith.constant 0 : i32
    %c0_i32_1 = arith.constant 0 : i32
    return %c0_i32, %c0_i32_0 : i32, i32
  }
  func.func @transform_12(%arg0: i32) -> (i32, i32) {
    %c0_i32 = arith.constant 0 : i32
    %c0_i32_0 = arith.constant 0 : i32
    %c0_i32_1 = arith.constant 0 : i32
    return %c0_i32, %c0_i32_0 : i32, i32
  }
  func.func @transform_13(%arg0: i32) -> (i32, i32) {
    %c0_i32 = arith.constant 0 : i32
    %c0_i32_0 = arith.constant 0 : i32
    %c0_i32_1 = arith.constant 0 : i32
    return %c0_i32, %c0_i32_0 : i32, i32
  }
  func.func @transform_14(%arg0: i32) -> (i32, i32) {
    %c0_i32 = arith.constant 0 : i32
    %c0_i32_0 = arith.constant 0 : i32
    %c0_i32_1 = arith.constant 0 : i32
    return %c0_i32, %c0_i32_0 : i32, i32
  }
  func.func @transform_15(%arg0: i32) -> (i32, i32) {
    %c0_i32 = arith.constant 0 : i32
    %c0_i32_0 = arith.constant 0 : i32
    %c0_i32_1 = arith.constant 0 : i32
    return %c0_i32, %c0_i32_0 : i32, i32
  }
  func.func @transform_16(%arg0: i32) -> (i32, i32) {
    %c0_i32 = arith.constant 0 : i32
    %c0_i32_0 = arith.constant 0 : i32
    %c0_i32_1 = arith.constant 0 : i32
    return %c0_i32, %c0_i32_0 : i32, i32
  }
  func.func @transform_17(%arg0: i32) -> (i32, i32) {
    %c0_i32 = arith.constant 0 : i32
    %c0_i32_0 = arith.constant 0 : i32
    %c0_i32_1 = arith.constant 0 : i32
    return %c0_i32, %c0_i32_0 : i32, i32
  }
  func.func @transform_18(%arg0: i32) -> (i32, i32) {
    %c0_i32 = arith.constant 0 : i32
    %c0_i32_0 = arith.constant 0 : i32
    %c0_i32_1 = arith.constant 0 : i32
    return %c0_i32, %c0_i32_0 : i32, i32
  }
  func.func @transform_19(%arg0: i32) -> (i32, i32, i32) {
    %c0_i32 = arith.constant 0 : i32
    %c0_i32_0 = arith.constant 0 : i32
    %c0_i32_1 = arith.constant 0 : i32
    return %arg0, %c0_i32, %c0_i32_0 : i32, i32, i32
  }
  func.func @transform_20(%arg0: i32) -> (i32, i32) {
    %c0_i32 = arith.constant 0 : i32
    %c0_i32_0 = arith.constant 0 : i32
    %c0_i32_1 = arith.constant 0 : i32
    return %c0_i32, %c0_i32_0 : i32, i32
  }
}

</mosaic_0001>

<llo_original>
// kernel: tpu_custom_call.1
$region0: #{tpu_custom_call.1}
  #allocation0 [shape = 'u32[]', space=smem, size = 0x4, offset = 0x4, fixed_abs, tag = 'smem constant byte address 0x4 - core index']
  #allocation1 [shape = 'u32[144,128]{1,0:T(1,128)}', space=vmem, size = 0x12000, scoped, tag = 'internal scratch']
  #allocation2 [shape = 'f32[64,32]{1,0:T(8,128)}', space=vmem, size = 0x8000, scoped, tag = 'scratch operand']
  %s0 = inlined_call_operand.vmem [shape: bf16[4,64,64], index: 0, kind: input, shape index: {}]
  %s1 = inlined_call_operand.vmem [shape: f32[64,32], index: 1, kind: input, shape index: {}]
  %s2 = inlined_call_operand.vmem [shape: f32[64,32], index: 2, kind: input, shape index: {}]
  %s3 = inlined_call_operand.vmem [shape: f32[64,96], index: 3, kind: input, shape index: {}]
  %s4 = inlined_call_operand.vmem [shape: bf16[32,32], index: 4, kind: input, shape index: {}]
  %s5 = inlined_call_operand.vmem [shape: f32[1,32], index: 5, kind: input, shape index: {}]
  %s6 = inlined_call_operand.vmem [shape: bf16[32,128], index: 6, kind: input, shape index: {}]
  %s7 = inlined_call_operand.hbm [shape: f32[1,128], index: 7, kind: input, shape index: {}]
  %s8 = inlined_call_operand.hbm [shape: bf16[32,32], index: 8, kind: input, shape index: {}]
  %s9 = inlined_call_operand.hbm [shape: f32[1,32], index: 9, kind: input, shape index: {}]
  %s10 = inlined_call_operand.vmem [shape: bf16[32,16], index: 10, kind: input, shape index: {}]
  %s11 = inlined_call_operand.hbm [shape: f32[1,16], index: 11, kind: input, shape index: {}]
  %s12 = inlined_call_operand.hbm [shape: bf16[16,32], index: 12, kind: input, shape index: {}]
  %s13 = inlined_call_operand.hbm [shape: f32[1,32], index: 13, kind: input, shape index: {}]
  %s14 = inlined_call_operand.vmem [shape: bf16[32,96], index: 14, kind: input, shape index: {}]
  %s15 = inlined_call_operand.hbm [shape: bf16[32,96], index: 15, kind: input, shape index: {}]
  %s16 = inlined_call_operand.vmem [shape: f32[1,96], index: 16, kind: input, shape index: {}]
  %s17 = inlined_call_operand.hbm [shape: bf16[32,32], index: 17, kind: input, shape index: {}]
  %s18 = inlined_call_operand.vmem [shape: f32[1,32], index: 18, kind: input, shape index: {}]
  %s19 = inlined_call_operand.hbm [shape: f32[4,64,128], index: 19, kind: output, shape index: {0}]
  %s20 = inlined_call_operand.vmem [shape: f32[64,32], index: 20, kind: output, shape index: {1}]
  %21 = xla_tuple %s19, %s20
  %s22 = sld [smem:[#allocation0]]
  $region157: #{tpu_custom_call.1} parent=0
    _
  %s24 = ssub.s32 1, %s22
  %s25 = scalar_select 0, %s24, %s22
  $region1: #{tpu_custom_call.1} parent=0
    #allocation3 [shape = 'u8[512]{0}', space=vmem, size = 0x400, scoped, tag = 'input window, operand 7, single buffered']
    #allocation4 [shape = 's32[2]{0}', space=sflag, size = 0x8, scoped, tag = 'scoped memory for tpu_custom_call.1']
    #allocation5 [shape = 's32[2]{0}', space=sflag, size = 0x8, scoped, tag = 'scoped memory for tpu_custom_call.1']
    #allocation6 [shape = 'u8[8192]{0}', space=vmem, size = 0x2000, scoped, tag = 'input window, operand 8, single buffered']
    #allocation7 [shape = 's32[1]{0}', space=sflag, size = 0x4, scoped, tag = 'scoped memory for tpu_custom_call.1']
    #allocation8 [shape = 'u8[512]{0}', space=vmem, size = 0x400, scoped, tag = 'input window, operand 9, single buffered']
    #allocation9 [shape = 'u8[512]{0}', space=vmem, size = 0x400, scoped, tag = 'input window, operand 11, single buffered']
    #allocation10 [shape = 's32[1]{0}', space=sflag, size = 0x4, scoped, tag = 'scoped memory for tpu_custom_call.1']
    #allocation11 [shape = 'u8[4096]{0}', space=vmem, size = 0x1000, scoped, tag = 'input window, operand 12, single buffered']
    #allocation12 [shape = 'u8[512]{0}', space=vmem, size = 0x400, scoped, tag = 'input window, operand 13, single buffered']
    #allocation13 [shape = 's32[1]{0}', space=sflag, size = 0x4, scoped, tag = 'scoped memory for tpu_custom_call.1']
    #allocation14 [shape = 'u8[8192]{0}', space=vmem, size = 0x2000, scoped, tag = 'input window, operand 15, single buffered']
    #allocation15 [shape = 'u8[8192]{0}', space=vmem, size = 0x2000, scoped, tag = 'input window, operand 17, single buffered']
    #allocation16 [shape = 's32[1]{0}', space=sflag, size = 0x4, scoped, tag = 'scoped memory for tpu_custom_call.1']
    #allocation17 [shape = 'u8[65536]{0}', space=vmem, size = 0x10000, scoped, tag = 'output window, operand 0']
    %26 = vsyncpa [#allocation4], 0
    %27 = vsyncpa [#allocation7], 0
    %28 = vsyncpa [#allocation10], 0
    %29 = vsyncpa [#allocation13], 0
    %30 = vsyncpa [#allocation16], 0
    %31 = vsyncpa [#allocation5], 0
    %s32 = scalar_lea.sflag [#allocation5], 1
    %33 = vsyncpa %s32, 0
    loop: start=0, step=1, limit=6
    $region2: #{tpu_custom_call.1} parent=1 // loop_pre_header
      _
    $region3: #{tpu_custom_call.1} parent=1 // loop_header
      %s35 = sphi 0, %s39
      %p36 = scmp.ge.s32.totalorder %s35, 6
      %s45 = sphi 0, %s47
      %s48 = sphi 0, %s45
      %s49 = sphi 0, %s48
      %s65 = sphi 0, %s49
      %s69 = sphi 0, %s69
      %s71 = sphi 0, %s69
      %s72 = sphi 0, %s71
      %s86 = sphi 0, %s72
      %s90 = sphi 0, %s90
      %s92 = sphi 0, %s90
      %s93 = sphi 0, %s92
      %s107 = sphi 0, %s93
      %s111 = sphi 0, %s111
      %s113 = sphi 0, %s111
      %s114 = sphi 0, %s113
      %s128 = sphi 0, %s114
      %s132 = sphi 0, %s132
      %s134 = sphi 0, %s132
      %s135 = sphi 0, %s134
      %s149 = sphi 0, %s135
      %s153 = sphi 0, %s153
      %s155 = sphi 0, %s153
      %s156 = sphi 0, %s155
      %s170 = sphi 0, %s156
      %s174 = sphi 0, %s174
      %s176 = sphi 0, %s174
      %s177 = sphi 0, %s176
      %s191 = sphi 0, %s177
      %s195 = sphi 0, %s195
      %s197 = sphi 0, %s195
      %s198 = sphi 0, %s197
      %s212 = sphi 0, %s198
      %s216 = sphi 0, %s216
      %s218 = sphi 0, %s216
      %s219 = sphi 0, %s218
      %s233 = sphi 0, %s219
      %s237 = sphi 0, %s237
      %s239 = sphi 0, %s237
      %s240 = sphi 0, %s239
      %s254 = sphi 0, %s240
      %s258 = sphi 0, %s258
      %s260 = sphi 0, %s258
      %s261 = sphi 0, %s260
      %s275 = sphi 0, %s261
      %s279 = sphi 0, %s279
      %s281 = sphi 0, %s279
      %s282 = sphi 0, %s281
      %s296 = sphi 0, %s282
      %s300 = sphi 0, %s300
      %s302 = sphi 0, %s300
      %s303 = sphi 0, %s302
      %s317 = sphi 0, %s303
      %s321 = sphi 0, %s321
      %s323 = sphi 0, %s321
      %s324 = sphi 0, %s323
      %s338 = sphi 0, %s324
      %s342 = sphi 0, %s342
      %s344 = sphi 0, %s342
      %s345 = sphi 0, %s344
      %s359 = sphi 0, %s345
      %s363 = sphi 0, %s363
      %s365 = sphi 0, %s363
      %s366 = sphi 0, %s365
      %s380 = sphi 0, %s366
      %s384 = sphi 0, %s384
      %s386 = sphi 0, %s384
      %s387 = sphi 0, %s386
      %s401 = sphi 0, %s387
      %s405 = sphi 0, %s405
      %s407 = sphi 0, %s405
      %s408 = sphi 0, %s407
      %s422 = sphi 0, %s408
      %s426 = sphi 0, %s426
      %s428 = sphi 0, %s426
      %s429 = sphi 0, %s428
      %s443 = sphi 0, %s429
      %s449 = sphi 0, %s451
      %s452 = sphi 0, %s449
      %s453 = sphi 0, %s452
      %s469 = sphi 0, %s453
      %s473 = sphi 0, %s473
      %s475 = sphi 0, %s473
      %s476 = sphi 0, %s475
      %s490 = sphi 0, %s476
    $region4: #{tpu_custom_call.1} parent=1 // loop_header_branch
      %38 = sbr.rel (%p36) target = $region8
    $region5: #{tpu_custom_call.1} parent=1 // loop_body
      %s40 = ssub.s32 %s35, 1
      %s41 = ssub.s32 %s35, 2
      %s42 = sadd.s32 %s35, 1
      %s43 = ssub.s32 %s35, %s42
      %p44 = scmp.eq.s32.totalorder %s43, 0
      %s46 = sadd.s32 %s45, 1
      %s47 = scalar_select %p44, %s45, %s46
      %p50 = pneg %p44
      %p51 = scmp.eq.s32.totalorder %s35, 3
      %p52 = por %p50, %p51
      %p53 = scmp.ne.s32.totalorder %s45, %s48
      %p54 = scmp.eq.s32.totalorder %s35, 0
      %p55 = por %p53, %p54
      %p56 = scmp.ne.s32.totalorder %s45, %s48
      %p57 = scmp.eq.s32.totalorder %s40, 3
      %p58 = por %p56, %p57
      %p59 = scmp.ne.s32.totalorder %s48, %s49
      %p60 = scmp.eq.s32.totalorder %s40, 0
      %p61 = por %p59, %p60
      %p62 = scmp.ne.s32.totalorder %s48, %s49
      %p63 = scmp.eq.s32.totalorder %s41, 3
      %p64 = por %p62, %p63
      %p66 = scmp.ne.s32.totalorder %s49, %s65
      %p67 = scmp.eq.s32.totalorder %s41, 0
      %p68 = por %p66, %p67
      %s70 = sadd.s32 %s69, 1
      %p73 = scmp.eq.s32.totalorder %s35, 3
      %p74 = scmp.ne.s32.totalorder %s69, %s71
      %p75 = scmp.eq.s32.totalorder %s35, 0
      %p76 = por %p74, %p75
      %p77 = scmp.ne.s32.totalorder %s69, %s71
      %p78 = scmp.eq.s32.totalorder %s40, 3
      %p79 = por %p77, %p78
      %p80 = scmp.ne.s32.totalorder %s71, %s72
      %p81 = scmp.eq.s32.totalorder %s40, 0
      %p82 = por %p80, %p81
      %p83 = scmp.ne.s32.totalorder %s71, %s72
      %p84 = scmp.eq.s32.totalorder %s41, 3
      %p85 = por %p83, %p84
      %p87 = scmp.ne.s32.totalorder %s72, %s86
      %p88 = scmp.eq.s32.totalorder %s41, 0
      %p89 = por %p87, %p88
      %s91 = sadd.s32 %s90, 1
      %p94 = scmp.eq.s32.totalorder %s35, 3
      %p95 = scmp.ne.s32.totalorder %s90, %s92
      %p96 = scmp.eq.s32.totalorder %s35, 0
      %p97 = por %p95, %p96
      %p98 = scmp.ne.s32.totalorder %s90, %s92
      %p99 = scmp.eq.s32.totalorder %s40, 3
      %p100 = por %p98, %p99
      %p101 = scmp.ne.s32.totalorder %s92, %s93
      %p102 = scmp.eq.s32.totalorder %s40, 0
      %p103 = por %p101, %p102
      %p104 = scmp.ne.s32.totalorder %s92, %s93
      %p105 = scmp.eq.s32.totalorder %s41, 3
      %p106 = por %p104, %p105
      %p108 = scmp.ne.s32.totalorder %s93, %s107
      %p109 = scmp.eq.s32.totalorder %s41, 0
      %p110 = por %p108, %p109
      %s112 = sadd.s32 %s111, 1
      %p115 = scmp.eq.s32.totalorder %s35, 3
      %p116 = scmp.ne.s32.totalorder %s111, %s113
      %p117 = scmp.eq.s32.totalorder %s35, 0
      %p118 = por %p116, %p117
      %p119 = scmp.ne.s32.totalorder %s111, %s113
      %p120 = scmp.eq.s32.totalorder %s40, 3
      %p121 = por %p119, %p120
      %p122 = scmp.ne.s32.totalorder %s113, %s114
      %p123 = scmp.eq.s32.totalorder %s40, 0
      %p124 = por %p122, %p123
      %p125 = scmp.ne.s32.totalorder %s113, %s114
      %p126 = scmp.eq.s32.totalorder %s41, 3
      %p127 = por %p125, %p126
      %p129 = scmp.ne.s32.totalorder %s114, %s128
      %p130 = scmp.eq.s32.totalorder %s41, 0
      %p131 = por %p129, %p130
      %s133 = sadd.s32 %s132, 1
      %p136 = scmp.eq.s32.totalorder %s35, 3
      %p137 = scmp.ne.s32.totalorder %s132, %s134
      %p138 = scmp.eq.s32.totalorder %s35, 0
      %p139 = por %p137, %p138
      %p140 = scmp.ne.s32.totalorder %s132, %s134
      %p141 = scmp.eq.s32.totalorder %s40, 3
      %p142 = por %p140, %p141
      %p143 = scmp.ne.s32.totalorder %s134, %s135
      %p144 = scmp.eq.s32.totalorder %s40, 0
      %p145 = por %p143, %p144
      %p146 = scmp.ne.s32.totalorder %s134, %s135
      %p147 = scmp.eq.s32.totalorder %s41, 3
      %p148 = por %p146, %p147
      %p150 = scmp.ne.s32.totalorder %s135, %s149
      %p151 = scmp.eq.s32.totalorder %s41, 0
      %p152 = por %p150, %p151
      %s154 = sadd.s32 %s153, 1
      %p157 = scmp.eq.s32.totalorder %s35, 3
      %p158 = scmp.ne.s32.totalorder %s153, %s155
      %p159 = scmp.eq.s32.totalorder %s35, 0
      %p160 = por %p158, %p159
      %p161 = scmp.ne.s32.totalorder %s153, %s155
      %p162 = scmp.eq.s32.totalorder %s40, 3
      %p163 = por %p161, %p162
      %p164 = scmp.ne.s32.totalorder %s155, %s156
      %p165 = scmp.eq.s32.totalorder %s40, 0
      %p166 = por %p164, %p165
      %p167 = scmp.ne.s32.totalorder %s155, %s156
      %p168 = scmp.eq.s32.totalorder %s41, 3
      %p169 = por %p167, %p168
      %p171 = scmp.ne.s32.totalorder %s156, %s170
      %p172 = scmp.eq.s32.totalorder %s41, 0
      %p173 = por %p171, %p172
      %s175 = sadd.s32 %s174, 1
      %p178 = scmp.eq.s32.totalorder %s35, 3
      %p179 = scmp.ne.s32.totalorder %s174, %s176
      %p180 = scmp.eq.s32.totalorder %s35, 0
      %p181 = por %p179, %p180
      %p182 = scmp.ne.s32.totalorder %s174, %s176
      %p183 = scmp.eq.s32.totalorder %s40, 3
      %p184 = por %p182, %p183
      %p185 = scmp.ne.s32.totalorder %s176, %s177
      %p186 = scmp.eq.s32.totalorder %s40, 0
      %p187 = por %p185, %p186
      %p188 = scmp.ne.s32.totalorder %s176, %s177
      %p189 = scmp.eq.s32.totalorder %s41, 3
      %p190 = por %p188, %p189
      %p192 = scmp.ne.s32.totalorder %s177, %s191
      %p193 = scmp.eq.s32.totalorder %s41, 0
      %p194 = por %p192, %p193
      %s196 = sadd.s32 %s195, 1
      %p199 = scmp.eq.s32.totalorder %s35, 3
      %p200 = scmp.ne.s32.totalorder %s195, %s197
      %p201 = scmp.eq.s32.totalorder %s35, 0
      %p202 = por %p200, %p201
      %p203 = scmp.ne.s32.totalorder %s195, %s197
      %p204 = scmp.eq.s32.totalorder %s40, 3
      %p205 = por %p203, %p204
      %p206 = scmp.ne.s32.totalorder %s197, %s198
      %p207 = scmp.eq.s32.totalorder %s40, 0
      %p208 = por %p206, %p207
      %p209 = scmp.ne.s32.totalorder %s197, %s198
      %p210 = scmp.eq.s32.totalorder %s41, 3
      %p211 = por %p209, %p210
      %p213 = scmp.ne.s32.totalorder %s198, %s212
      %p214 = scmp.eq.s32.totalorder %s41, 0
      %p215 = por %p213, %p214
      %s217 = sadd.s32 %s216, 1
      %p220 = scmp.eq.s32.totalorder %s35, 3
      %p221 = scmp.ne.s32.totalorder %s216, %s218
      %p222 = scmp.eq.s32.totalorder %s35, 0
      %p223 = por %p221, %p222
      %p224 = scmp.ne.s32.totalorder %s216, %s218
      %p225 = scmp.eq.s32.totalorder %s40, 3
      %p226 = por %p224, %p225
      %p227 = scmp.ne.s32.totalorder %s218, %s219
      %p228 = scmp.eq.s32.totalorder %s40, 0
      %p229 = por %p227, %p228
      %p230 = scmp.ne.s32.totalorder %s218, %s219
      %p231 = scmp.eq.s32.totalorder %s41, 3
      %p232 = por %p230, %p231
      %p234 = scmp.ne.s32.totalorder %s219, %s233
      %p235 = scmp.eq.s32.totalorder %s41, 0
      %p236 = por %p234, %p235
      %s238 = sadd.s32 %s237, 1
      %p241 = scmp.eq.s32.totalorder %s35, 3
      %p242 = scmp.ne.s32.totalorder %s237, %s239
      %p243 = scmp.eq.s32.totalorder %s35, 0
      %p244 = por %p242, %p243
      %p245 = scmp.ne.s32.totalorder %s237, %s239
      %p246 = scmp.eq.s32.totalorder %s40, 3
      %p247 = por %p245, %p246
      %p248 = scmp.ne.s32.totalorder %s239, %s240
      %p249 = scmp.eq.s32.totalorder %s40, 0
      %p250 = por %p248, %p249
      %p251 = scmp.ne.s32.totalorder %s239, %s240
      %p252 = scmp.eq.s32.totalorder %s41, 3
      %p253 = por %p251, %p252
      %p255 = scmp.ne.s32.totalorder %s240, %s254
      %p256 = scmp.eq.s32.totalorder %s41, 0
      %p257 = por %p255, %p256
      %s259 = sadd.s32 %s258, 1
      %p262 = scmp.eq.s32.totalorder %s35, 3
      %p263 = scmp.ne.s32.totalorder %s258, %s260
      %p264 = scmp.eq.s32.totalorder %s35, 0
      %p265 = por %p263, %p264
      %p266 = scmp.ne.s32.totalorder %s258, %s260
      %p267 = scmp.eq.s32.totalorder %s40, 3
      %p268 = por %p266, %p267
      %p269 = scmp.ne.s32.totalorder %s260, %s261
      %p270 = scmp.eq.s32.totalorder %s40, 0
      %p271 = por %p269, %p270
      %p272 = scmp.ne.s32.totalorder %s260, %s261
      %p273 = scmp.eq.s32.totalorder %s41, 3
      %p274 = por %p272, %p273
      %p276 = scmp.ne.s32.totalorder %s261, %s275
      %p277 = scmp.eq.s32.totalorder %s41, 0
      %p278 = por %p276, %p277
      %s280 = sadd.s32 %s279, 1
      %p283 = scmp.eq.s32.totalorder %s35, 3
      %p284 = scmp.ne.s32.totalorder %s279, %s281
      %p285 = scmp.eq.s32.totalorder %s35, 0
      %p286 = por %p284, %p285
      %p287 = scmp.ne.s32.totalorder %s279, %s281
      %p288 = scmp.eq.s32.totalorder %s40, 3
      %p289 = por %p287, %p288
      %p290 = scmp.ne.s32.totalorder %s281, %s282
      %p291 = scmp.eq.s32.totalorder %s40, 0
      %p292 = por %p290, %p291
      %p293 = scmp.ne.s32.totalorder %s281, %s282
      %p294 = scmp.eq.s32.totalorder %s41, 3
      %p295 = por %p293, %p294
      %p297 = scmp.ne.s32.totalorder %s282, %s296
      %p298 = scmp.eq.s32.totalorder %s41, 0
      %p299 = por %p297, %p298
      %s301 = sadd.s32 %s300, 1
      %p304 = scmp.eq.s32.totalorder %s35, 3
      %p305 = scmp.ne.s32.totalorder %s300, %s302
      %p306 = scmp.eq.s32.totalorder %s35, 0
      %p307 = por %p305, %p306
      %p308 = scmp.ne.s32.totalorder %s300, %s302
      %p309 = scmp.eq.s32.totalorder %s40, 3
      %p310 = por %p308, %p309
      %p311 = scmp.ne.s32.totalorder %s302, %s303
      %p312 = scmp.eq.s32.totalorder %s40, 0
      %p313 = por %p311, %p312
      %p314 = scmp.ne.s32.totalorder %s302, %s303
      %p315 = scmp.eq.s32.totalorder %s41, 3
      %p316 = por %p314, %p315
      %p318 = scmp.ne.s32.totalorder %s303, %s317
      %p319 = scmp.eq.s32.totalorder %s41, 0
      %p320 = por %p318, %p319
      %s322 = sadd.s32 %s321, 1
      %p325 = scmp.eq.s32.totalorder %s35, 3
      %p326 = scmp.ne.s32.totalorder %s321, %s323
      %p327 = scmp.eq.s32.totalorder %s35, 0
      %p328 = por %p326, %p327
      %p329 = scmp.ne.s32.totalorder %s321, %s323
      %p330 = scmp.eq.s32.totalorder %s40, 3
      %p331 = por %p329, %p330
      %p332 = scmp.ne.s32.totalorder %s323, %s324
      %p333 = scmp.eq.s32.totalorder %s40, 0
      %p334 = por %p332, %p333
      %p335 = scmp.ne.s32.totalorder %s323, %s324
      %p336 = scmp.eq.s32.totalorder %s41, 3
      %p337 = por %p335, %p336
      %p339 = scmp.ne.s32.totalorder %s324, %s338
      %p340 = scmp.eq.s32.totalorder %s41, 0
      %p341 = por %p339, %p340
      %s343 = sadd.s32 %s342, 1
      %p346 = scmp.eq.s32.totalorder %s35, 3
      %p347 = scmp.ne.s32.totalorder %s342, %s344
      %p348 = scmp.eq.s32.totalorder %s35, 0
      %p349 = por %p347, %p348
      %p350 = scmp.ne.s32.totalorder %s342, %s344
      %p351 = scmp.eq.s32.totalorder %s40, 3
      %p352 = por %p350, %p351
      %p353 = scmp.ne.s32.totalorder %s344, %s345
      %p354 = scmp.eq.s32.totalorder %s40, 0
      %p355 = por %p353, %p354
      %p356 = scmp.ne.s32.totalorder %s344, %s345
      %p357 = scmp.eq.s32.totalorder %s41, 3
      %p358 = por %p356, %p357
      %p360 = scmp.ne.s32.totalorder %s345, %s359
      %p361 = scmp.eq.s32.totalorder %s41, 0
      %p362 = por %p360, %p361
      %s364 = sadd.s32 %s363, 1
      %p367 = scmp.eq.s32.totalorder %s35, 3
      %p368 = scmp.ne.s32.totalorder %s363, %s365
      %p369 = scmp.eq.s32.totalorder %s35, 0
      %p370 = por %p368, %p369
      %p371 = scmp.ne.s32.totalorder %s363, %s365
      %p372 = scmp.eq.s32.totalorder %s40, 3
      %p373 = por %p371, %p372
      %p374 = scmp.ne.s32.totalorder %s365, %s366
      %p375 = scmp.eq.s32.totalorder %s40, 0
      %p376 = por %p374, %p375
      %p377 = scmp.ne.s32.totalorder %s365, %s366
      %p378 = scmp.eq.s32.totalorder %s41, 3
      %p379 = por %p377, %p378
      %p381 = scmp.ne.s32.totalorder %s366, %s380
      %p382 = scmp.eq.s32.totalorder %s41, 0
      %p383 = por %p381, %p382
      %s385 = sadd.s32 %s384, 1
      %p388 = scmp.eq.s32.totalorder %s35, 3
      %p389 = scmp.ne.s32.totalorder %s384, %s386
      %p390 = scmp.eq.s32.totalorder %s35, 0
      %p391 = por %p389, %p390
      %p392 = scmp.ne.s32.totalorder %s384, %s386
      %p393 = scmp.eq.s32.totalorder %s40, 3
      %p394 = por %p392, %p393
      %p395 = scmp.ne.s32.totalorder %s386, %s387
      %p396 = scmp.eq.s32.totalorder %s40, 0
      %p397 = por %p395, %p396
      %p398 = scmp.ne.s32.totalorder %s386, %s387
      %p399 = scmp.eq.s32.totalorder %s41, 3
      %p400 = por %p398, %p399
      %p402 = scmp.ne.s32.totalorder %s387, %s401
      %p403 = scmp.eq.s32.totalorder %s41, 0
      %p404 = por %p402, %p403
      %s406 = sadd.s32 %s405, 1
      %p409 = scmp.eq.s32.totalorder %s35, 3
      %p410 = scmp.ne.s32.totalorder %s405, %s407
      %p411 = scmp.eq.s32.totalorder %s35, 0
      %p412 = por %p410, %p411
      %p413 = scmp.ne.s32.totalorder %s405, %s407
      %p414 = scmp.eq.s32.totalorder %s40, 3
      %p415 = por %p413, %p414
      %p416 = scmp.ne.s32.totalorder %s407, %s408
      %p417 = scmp.eq.s32.totalorder %s40, 0
      %p418 = por %p416, %p417
      %p419 = scmp.ne.s32.totalorder %s407, %s408
      %p420 = scmp.eq.s32.totalorder %s41, 3
      %p421 = por %p419, %p420
      %p423 = scmp.ne.s32.totalorder %s408, %s422
      %p424 = scmp.eq.s32.totalorder %s41, 0
      %p425 = por %p423, %p424
      %s427 = sadd.s32 %s426, 1
      %p430 = scmp.eq.s32.totalorder %s35, 3
      %p431 = scmp.ne.s32.totalorder %s426, %s428
      %p432 = scmp.eq.s32.totalorder %s35, 0
      %p433 = por %p431, %p432
      %p434 = scmp.ne.s32.totalorder %s426, %s428
      %p435 = scmp.eq.s32.totalorder %s40, 3
      %p436 = por %p434, %p435
      %p437 = scmp.ne.s32.totalorder %s428, %s429
      %p438 = scmp.eq.s32.totalorder %s40, 0
      %p439 = por %p437, %p438
      %p440 = scmp.ne.s32.totalorder %s428, %s429
      %p441 = scmp.eq.s32.totalorder %s41, 3
      %p442 = por %p440, %p441
      %p444 = scmp.ne.s32.totalorder %s429, %s443
      %p445 = scmp.eq.s32.totalorder %s41, 0
      %p446 = por %p444, %p445
      %s447 = ssub.s32 %s35, %s42
      %p448 = scmp.eq.s32.totalorder %s447, 0
      %s450 = sadd.s32 %s449, 1
      %s451 = scalar_select %p448, %s449, %s450
      %p454 = pneg %p448
      %p455 = scmp.eq.s32.totalorder %s35, 3
      %p456 = por %p454, %p455
      %p457 = scmp.ne.s32.totalorder %s449, %s452
      %p458 = scmp.eq.s32.totalorder %s35, 0
      %p459 = por %p457, %p458
      %p460 = scmp.ne.s32.totalorder %s449, %s452
      %p461 = scmp.eq.s32.totalorder %s40, 3
      %p462 = por %p460, %p461
      %p463 = scmp.ne.s32.totalorder %s452, %s453
      %p464 = scmp.eq.s32.totalorder %s40, 0
      %p465 = por %p463, %p464
      %p466 = scmp.ne.s32.totalorder %s452, %s453
      %p467 = scmp.eq.s32.totalorder %s41, 3
      %p468 = por %p466, %p467
      %p470 = scmp.ne.s32.totalorder %s453, %s469
      %p471 = scmp.eq.s32.totalorder %s41, 0
      %p472 = por %p470, %p471
      %s474 = sadd.s32 %s473, 1
      %p477 = scmp.eq.s32.totalorder %s35, 3
      %p478 = scmp.ne.s32.totalorder %s473, %s475
      %p479 = scmp.eq.s32.totalorder %s35, 0
      %p480 = por %p478, %p479
      %p481 = scmp.ne.s32.totalorder %s473, %s475
      %p482 = scmp.eq.s32.totalorder %s40, 3
      %p483 = por %p481, %p482
      %p484 = scmp.ne.s32.totalorder %s475, %s476
      %p485 = scmp.eq.s32.totalorder %s40, 0
      %p486 = por %p484, %p485
      %p487 = scmp.ne.s32.totalorder %s475, %s476
      %p488 = scmp.eq.s32.totalorder %s41, 3
      %p489 = por %p487, %p488
      %p491 = scmp.ne.s32.totalorder %s476, %s490
      %p492 = scmp.eq.s32.totalorder %s41, 0
      %p493 = por %p491, %p492
      %p494 = scmp.le.s32.totalorder 1, %s35
      %p495 = scmp.lt.s32.totalorder %s35, 5
      %p496 = pnand %p494, %p495
      %p497 = pneg %p496
      // Predicated region
      $region9: #{tpu_custom_call.1} parent=5 // pred_check
        _
      $region10: #{tpu_custom_call.1} parent=5 // pred_check_branch
        %499 = sbr.rel (%p496) target = $region12
      $region11: #{tpu_custom_call.1} parent=5 // pred_region
        %s500 = ssub.s32 %s35, 1
        // Predicated region
        $region13: #{tpu_custom_call.1} parent=11 // pred_check
          %p501 = pneg %p82
        $region14: #{tpu_custom_call.1} parent=11 // pred_check_branch
          %503 = sbr.rel (%p501) target = $region16
        $region15: #{tpu_custom_call.1} parent=11 // pred_region
          _
        $region16: #{tpu_custom_call.1} parent=11 // pred_fallthru
          _
        // Predicated region
        $region17: #{tpu_custom_call.1} parent=11 // pred_check
          %p504 = pneg %p103
        $region18: #{tpu_custom_call.1} parent=11 // pred_check_branch
          %506 = sbr.rel (%p504) target = $region20
        $region19: #{tpu_custom_call.1} parent=11 // pred_region
          _
        $region20: #{tpu_custom_call.1} parent=11 // pred_fallthru
          _
        // Predicated region
        $region21: #{tpu_custom_call.1} parent=11 // pred_check
          %p507 = pneg %p124
        $region22: #{tpu_custom_call.1} parent=11 // pred_check_branch
          %509 = sbr.rel (%p507) target = $region24
        $region23: #{tpu_custom_call.1} parent=11 // pred_region
          _
        $region24: #{tpu_custom_call.1} parent=11 // pred_fallthru
          _
        // Predicated region
        $region25: #{tpu_custom_call.1} parent=11 // pred_check
          %p510 = pneg %p145
        $region26: #{tpu_custom_call.1} parent=11 // pred_check_branch
          %512 = sbr.rel (%p510) target = $region28
        $region27: #{tpu_custom_call.1} parent=11 // pred_region
          _
        $region28: #{tpu_custom_call.1} parent=11 // pred_fallthru
          _
        // Predicated region
        $region29: #{tpu_custom_call.1} parent=11 // pred_check
          %p513 = pneg %p166
        $region30: #{tpu_custom_call.1} parent=11 // pred_check_branch
          %515 = sbr.rel (%p513) target = $region32
        $region31: #{tpu_custom_call.1} parent=11 // pred_region
          _
        $region32: #{tpu_custom_call.1} parent=11 // pred_fallthru
          _
        // Predicated region
        $region33: #{tpu_custom_call.1} parent=11 // pred_check
          %p516 = pneg %p187
        $region34: #{tpu_custom_call.1} parent=11 // pred_check_branch
          %518 = sbr.rel (%p516) target = $region36
        $region35: #{tpu_custom_call.1} parent=11 // pred_region
          _
        $region36: #{tpu_custom_call.1} parent=11 // pred_fallthru
          _
        // Predicated region
        $region37: #{tpu_custom_call.1} parent=11 // pred_check
          %p519 = pneg %p208
        $region38: #{tpu_custom_call.1} parent=11 // pred_check_branch
          %521 = sbr.rel (%p519) target = $region40
        $region39: #{tpu_custom_call.1} parent=11 // pred_region
          %s523 = ssub.s32 16, 16
          %524 = vsyncadd [#allocation4], %s523
          %s526 = sshll.u32 [#allocation3], 4
          %s527 = int_to_ptr.vmem [resolvable:$true] %s526
          %529 = dma.hbm_to_vmem [thread:$0]  %s7, 16, %s527, [#allocation4]
        $region40: #{tpu_custom_call.1} parent=11 // pred_fallthru
          _
        // Predicated region
        $region41: #{tpu_custom_call.1} parent=11 // pred_check
          %p530 = pneg %p229
        $region42: #{tpu_custom_call.1} parent=11 // pred_check_branch
          %532 = sbr.rel (%p530) target = $region44
        $region43: #{tpu_custom_call.1} parent=11 // pred_region
          %s534 = ssub.s32 256, 256
          %535 = vsyncadd [#allocation7], %s534
          %s536 = sshll.u32 [#allocation6], 4
          %s537 = int_to_ptr.vmem [resolvable:$true] %s536
          %542 = dma.hbm_to_vmem [thread:$0]  %s8, 256, %s537, [#allocation7], 64, 64, 4
        $region44: #{tpu_custom_call.1} parent=11 // pred_fallthru
          _
        // Predicated region
        $region45: #{tpu_custom_call.1} parent=11 // pred_check
          %p543 = pneg %p250
        $region46: #{tpu_custom_call.1} parent=11 // pred_check_branch
          %545 = sbr.rel (%p543) target = $region48
        $region47: #{tpu_custom_call.1} parent=11 // pred_region
          %s547 = ssub.s32 16, 16
          %548 = vsyncadd [#allocation7], %s547
          %s550 = sshll.u32 [#allocation8], 4
          %s551 = int_to_ptr.vmem [resolvable:$true] %s550
          %553 = dma.hbm_to_vmem [thread:$0]  %s9, 16, %s551, [#allocation7]
        $region48: #{tpu_custom_call.1} parent=11 // pred_fallthru
          _
        // Predicated region
        $region49: #{tpu_custom_call.1} parent=11 // pred_check
          %p554 = pneg %p271
        $region50: #{tpu_custom_call.1} parent=11 // pred_check_branch
          %556 = sbr.rel (%p554) target = $region52
        $region51: #{tpu_custom_call.1} parent=11 // pred_region
          _
        $region52: #{tpu_custom_call.1} parent=11 // pred_fallthru
          _
        // Predicated region
        $region53: #{tpu_custom_call.1} parent=11 // pred_check
          %p557 = pneg %p292
        $region54: #{tpu_custom_call.1} parent=11 // pred_check_branch
          %559 = sbr.rel (%p557) target = $region56
        $region55: #{tpu_custom_call.1} parent=11 // pred_region
          %s561 = ssub.s32 16, 16
          %562 = vsyncadd [#allocation10], %s561
          %s564 = sshll.u32 [#allocation9], 4
          %s565 = int_to_ptr.vmem [resolvable:$true] %s564
          %567 = dma.hbm_to_vmem [thread:$0]  %s11, 16, %s565, [#allocation10]
        $region56: #{tpu_custom_call.1} parent=11 // pred_fallthru
          _
        // Predicated region
        $region57: #{tpu_custom_call.1} parent=11 // pred_check
          %p568 = pneg %p313
        $region58: #{tpu_custom_call.1} parent=11 // pred_check_branch
          %570 = sbr.rel (%p568) target = $region60
        $region59: #{tpu_custom_call.1} parent=11 // pred_region
          %s572 = ssub.s32 128, 128
          %573 = vsyncadd [#allocation10], %s572
          %s574 = sshll.u32 [#allocation11], 4
          %s575 = int_to_ptr.vmem [resolvable:$true] %s574
          %580 = dma.hbm_to_vmem [thread:$0]  %s12, 128, %s575, [#allocation10], 64, 64, 4
        $region60: #{tpu_custom_call.1} parent=11 // pred_fallthru
          _
        // Predicated region
        $region61: #{tpu_custom_call.1} parent=11 // pred_check
          %p581 = pneg %p334
        $region62: #{tpu_custom_call.1} parent=11 // pred_check_branch
          %583 = sbr.rel (%p581) target = $region64
        $region63: #{tpu_custom_call.1} parent=11 // pred_region
          %s585 = ssub.s32 16, 16
          %586 = vsyncadd [#allocation13], %s585
          %s588 = sshll.u32 [#allocation12], 4
          %s589 = int_to_ptr.vmem [resolvable:$true] %s588
          %591 = dma.hbm_to_vmem [thread:$0]  %s13, 16, %s589, [#allocation13]
        $region64: #{tpu_custom_call.1} parent=11 // pred_fallthru
          _
        // Predicated region
        $region65: #{tpu_custom_call.1} parent=11 // pred_check
          %p592 = pneg %p355
        $region66: #{tpu_custom_call.1} parent=11 // pred_check_branch
          %594 = sbr.rel (%p592) target = $region68
        $region67: #{tpu_custom_call.1} parent=11 // pred_region
          _
        $region68: #{tpu_custom_call.1} parent=11 // pred_fallthru
          _
        // Predicated region
        $region69: #{tpu_custom_call.1} parent=11 // pred_check
          %p595 = pneg %p376
        $region70: #{tpu_custom_call.1} parent=11 // pred_check_branch
          %597 = sbr.rel (%p595) target = $region72
        $region71: #{tpu_custom_call.1} parent=11 // pred_region
          %s599 = ssub.s32 256, 256
          %600 = vsyncadd [#allocation13], %s599
          %s601 = sshll.u32 [#allocation14], 4
          %s602 = int_to_ptr.vmem [resolvable:$true] %s601
          %607 = dma.hbm_to_vmem [thread:$0]  %s15, 256, %s602, [#allocation13], 64, 64, 4
        $region72: #{tpu_custom_call.1} parent=11 // pred_fallthru
          _
        // Predicated region
        $region73: #{tpu_custom_call.1} parent=11 // pred_check
          %p608 = pneg %p397
        $region74: #{tpu_custom_call.1} parent=11 // pred_check_branch
          %610 = sbr.rel (%p608) target = $region76
        $region75: #{tpu_custom_call.1} parent=11 // pred_region
          _
        $region76: #{tpu_custom_call.1} parent=11 // pred_fallthru
          _
        // Predicated region
        $region77: #{tpu_custom_call.1} parent=11 // pred_check
          %p611 = pneg %p418
        $region78: #{tpu_custom_call.1} parent=11 // pred_check_branch
          %613 = sbr.rel (%p611) target = $region80
        $region79: #{tpu_custom_call.1} parent=11 // pred_region
          %s615 = ssub.s32 256, 256
          %616 = vsyncadd [#allocation16], %s615
          %s617 = sshll.u32 [#allocation15], 4
          %s618 = int_to_ptr.vmem [resolvable:$true] %s617
          %623 = dma.hbm_to_vmem [thread:$0]  %s17, 256, %s618, [#allocation16], 64, 64, 4
        $region80: #{tpu_custom_call.1} parent=11 // pred_fallthru
          _
        // Predicated region
        $region81: #{tpu_custom_call.1} parent=11 // pred_check
          %p624 = pneg %p439
        $region82: #{tpu_custom_call.1} parent=11 // pred_check_branch
          %626 = sbr.rel (%p624) target = $region84
        $region83: #{tpu_custom_call.1} parent=11 // pred_region
          _
        $region84: #{tpu_custom_call.1} parent=11 // pred_fallthru
          _
      $region12: #{tpu_custom_call.1} parent=5 // pred_fallthru
        _
      %p627 = scmp.lt.s32.totalorder %s35, 4
      // Predicated region
      $region85: #{tpu_custom_call.1} parent=5 // pred_check
        %p628 = pneg %p627
      $region86: #{tpu_custom_call.1} parent=5 // pred_check_branch
        %630 = sbr.rel (%p628) target = $region88
      $region87: #{tpu_custom_call.1} parent=5 // pred_region
        // Predicated region
        $region89: #{tpu_custom_call.1} parent=87 // pred_check
          %p631 = pneg %p55
        $region90: #{tpu_custom_call.1} parent=87 // pred_check_branch
          %633 = sbr.rel (%p631) target = $region92
        $region91: #{tpu_custom_call.1} parent=87 // pred_region
          %p634 = scmp.lt.s32.totalorder %s35, 3
          %s635 = scalar_select %p634, %s35, 3
          %s636 = smul.addr %s635, 8
          %s637 = smul.addr %s636, 4
          %s638 = scalar_lea.vmem %s0, %s637
        $region92: #{tpu_custom_call.1} parent=87 // pred_fallthru
          _
      $region88: #{tpu_custom_call.1} parent=5 // pred_fallthru
        _
      %p639 = scmp.le.s32.totalorder 1, %s35
      %p640 = scmp.lt.s32.totalorder %s35, 5
      %p641 = pnand %p639, %p640
      %p642 = pneg %p641
      // Predicated region
      $region93: #{tpu_custom_call.1} parent=5 // pred_check
        _
      $region94: #{tpu_custom_call.1} parent=5 // pred_check_branch
        %644 = sbr.rel (%p641) target = $region96
      $region95: #{tpu_custom_call.1} parent=5 // pred_region
        %s645 = ssub.s32 %s35, 1
        // Predicated region
        $region97: #{tpu_custom_call.1} parent=95 // pred_check
          %p646 = pneg %p208
        $region98: #{tpu_custom_call.1} parent=95 // pred_check_branch
          %648 = sbr.rel (%p646) target = $region100
        $region99: #{tpu_custom_call.1} parent=95 // pred_region
          %649 = dma.done [#allocation4], 16
        $region100: #{tpu_custom_call.1} parent=95 // pred_fallthru
          _
        // Predicated region
        $region101: #{tpu_custom_call.1} parent=95 // pred_check
          %p650 = pneg %p229
        $region102: #{tpu_custom_call.1} parent=95 // pred_check_branch
          %652 = sbr.rel (%p650) target = $region104
        $region103: #{tpu_custom_call.1} parent=95 // pred_region
          %653 = dma.done [#allocation7], 256
        $region104: #{tpu_custom_call.1} parent=95 // pred_fallthru
          _
        // Predicated region
        $region105: #{tpu_custom_call.1} parent=95 // pred_check
          %p654 = pneg %p250
        $region106: #{tpu_custom_call.1} parent=95 // pred_check_branch
          %656 = sbr.rel (%p654) target = $region108
        $region107: #{tpu_custom_call.1} parent=95 // pred_region
          %657 = dma.done [#allocation7], 16
        $region108: #{tpu_custom_call.1} parent=95 // pred_fallthru
          _
        // Predicated region
        $region109: #{tpu_custom_call.1} parent=95 // pred_check
          %p658 = pneg %p292
        $region110: #{tpu_custom_call.1} parent=95 // pred_check_branch
          %660 = sbr.rel (%p658) target = $region112
        $region111: #{tpu_custom_call.1} parent=95 // pred_region
          %661 = dma.done [#allocation10], 16
        $region112: #{tpu_custom_call.1} parent=95 // pred_fallthru
          _
        // Predicated region
        $region113: #{tpu_custom_call.1} parent=95 // pred_check
          %p662 = pneg %p313
        $region114: #{tpu_custom_call.1} parent=95 // pred_check_branch
          %664 = sbr.rel (%p662) target = $region116
        $region115: #{tpu_custom_call.1} parent=95 // pred_region
          %665 = dma.done [#allocation10], 128
        $region116: #{tpu_custom_call.1} parent=95 // pred_fallthru
          _
        // Predicated region
        $region117: #{tpu_custom_call.1} parent=95 // pred_check
          %p666 = pneg %p334
        $region118: #{tpu_custom_call.1} parent=95 // pred_check_branch
          %668 = sbr.rel (%p666) target = $region120
        $region119: #{tpu_custom_call.1} parent=95 // pred_region
          %669 = dma.done [#allocation13], 16
        $region120: #{tpu_custom_call.1} parent=95 // pred_fallthru
          _
        // Predicated region
        $region121: #{tpu_custom_call.1} parent=95 // pred_check
          %p670 = pneg %p376
        $region122: #{tpu_custom_call.1} parent=95 // pred_check_branch
          %672 = sbr.rel (%p670) target = $region124
        $region123: #{tpu_custom_call.1} parent=95 // pred_region
          %673 = dma.done [#allocation13], 256
        $region124: #{tpu_custom_call.1} parent=95 // pred_fallthru
          _
        // Predicated region
        $region125: #{tpu_custom_call.1} parent=95 // pred_check
          %p674 = pneg %p418
        $region126: #{tpu_custom_call.1} parent=95 // pred_check_branch
          %676 = sbr.rel (%p674) target = $region128
        $region127: #{tpu_custom_call.1} parent=95 // pred_region
          %677 = dma.done [#allocation16], 256
        $region128: #{tpu_custom_call.1} parent=95 // pred_fallthru
          _
        %p678 = scmp.lt.s32.totalorder %s40, 3
        %s679 = scalar_select %p678, %s40, 3
        %s680 = smul.addr %s679, 8
        %s681 = smul.addr %s680, 4
        %s682 = scalar_lea.vmem %s0, %s681
        %p683 = pneg %p61
        %p684 = pneg %p58
        %p685 = pneg %p82
        %p686 = pneg %p79
        %p687 = pneg %p103
        %p688 = pneg %p100
        %p689 = pneg %p124
        %p690 = pneg %p121
        %p691 = pneg %p145
        %p692 = pneg %p142
        %p693 = pneg %p166
        %p694 = pneg %p163
        %p695 = pneg %p187
        %p696 = pneg %p184
        %p697 = pneg %p208
        %p698 = pneg %p205
        %p699 = pneg %p229
        %p700 = pneg %p226
        %p701 = pneg %p250
        %p702 = pneg %p247
        %p703 = pneg %p271
        %p704 = pneg %p268
        %p705 = pneg %p292
        %p706 = pneg %p289
        %p707 = pneg %p313
        %p708 = pneg %p310
        %p709 = pneg %p334
        %p710 = pneg %p331
        %p711 = pneg %p355
        %p712 = pneg %p352
        %p713 = pneg %p376
        %p714 = pneg %p373
        %p715 = pneg %p397
        %p716 = pneg %p394
        %p717 = pneg %p418
        %p718 = pneg %p415
        %p719 = pneg %p439
        %p720 = pneg %p436
        %p721 = pneg %p465
        %p722 = pneg %p462
        %s723 = sand.u32 %s452, 1
        %s724 = scalar_lea.sflag [#allocation5], %s723
        %s725 = sand.u32 %s452, 1
        %s726 = smul.addr %s725, 64
        %s727 = scalar_lea.vmem [#allocation17], %s726
        %p728 = pneg %p486
        %p729 = pneg %p483
        %p730 = scmp.lt.s32.totalorder %s40, 3
        %s731 = scalar_select %p730, %s40, 3
        %s732 = smul.addr %s731, 8
        %s733 = smul.addr %s732, 4
        %s734 = scalar_lea.vmem %s0, %s733
        %p736 = scmp.eq.s32.totalorder %s40, 0
        // Predicated region
        $region129: #{tpu_custom_call.1} parent=95 // pred_check
          %p737 = pneg %p736
        $region130: #{tpu_custom_call.1} parent=95 // pred_check_branch
          %739 = sbr.rel (%p737) target = $region132
        $region131: #{tpu_custom_call.1} parent=95 // pred_region
          %v740 = vld [vmem:[%s1] sm:$0xff]
          %v741 = vld [vmem:[%s1 + $0x8] sm:$0xff]
          %v742 = vld [vmem:[%s1 + $0x10] sm:$0xff]
          %v743 = vld [vmem:[%s1 + $0x18] sm:$0xff]
          %v744 = vld [vmem:[%s1 + $0x20] sm:$0xff]
          %v745 = vld [vmem:[%s1 + $0x28] sm:$0xff]
          %v746 = vld [vmem:[%s1 + $0x30] sm:$0xff]
          %v747 = vld [vmem:[%s1 + $0x38] sm:$0xff]
          %vm748 = vcmask 261120
          %749 = vst.msk [vmem:[#allocation2] sm:$0xff] %vm748, %v740
          %750 = vst.msk [vmem:[#allocation2 + $0x8] sm:$0xff] %vm748, %v741
          %751 = vst.msk [vmem:[#allocation2 + $0x10] sm:$0xff] %vm748, %v742
          %752 = vst.msk [vmem:[#allocation2 + $0x18] sm:$0xff] %vm748, %v743
          %753 = vst.msk [vmem:[#allocation2 + $0x20] sm:$0xff] %vm748, %v744
          %754 = vst.msk [vmem:[#allocation2 + $0x28] sm:$0xff] %vm748, %v745
          %755 = vst.msk [vmem:[#allocation2 + $0x30] sm:$0xff] %vm748, %v746
          %756 = vst.msk [vmem:[#allocation2 + $0x38] sm:$0xff] %vm748, %v747
        $region132: #{tpu_custom_call.1} parent=95 // pred_fallthru
          _
        %v757 = vld [vmem:[%s734] sm:$0xf]
        %v758 = vld [vmem:[%s734 + $0x4] sm:$0xf]
        %v759 = vld [vmem:[%s734 + $0x8] sm:$0xf]
        %v760 = vld [vmem:[%s734 + $0xc] sm:$0xf]
        %v761 = vld [vmem:[%s734 + $0x10] sm:$0xf]
        %v762 = vld [vmem:[%s734 + $0x14] sm:$0xf]
        %v763 = vld [vmem:[%s734 + $0x18] sm:$0xf]
        %v764 = vld [vmem:[%s734 + $0x1c] sm:$0xf]
        %v765 = vld [vmem:[#allocation2] sm:$0xff]
        %v766 = vld [vmem:[#allocation2 + $0x8] sm:$0xff]
        %v767 = vld [vmem:[#allocation2 + $0x10] sm:$0xff]
        %v768 = vld [vmem:[#allocation2 + $0x18] sm:$0xff]
        %v769 = vld [vmem:[#allocation2 + $0x20] sm:$0xff]
        %v770 = vld [vmem:[#allocation2 + $0x28] sm:$0xff]
        %v771 = vld [vmem:[#allocation2 + $0x30] sm:$0xff]
        %v772 = vld [vmem:[#allocation2 + $0x38] sm:$0xff]
        %v773 = vpack.c.bf16 %v766, %v765
        %v774 = vpack.c.bf16 %v768, %v767
        %v775 = vpack.c.bf16 %v770, %v769
        %v776 = vpack.c.bf16 %v772, %v771
        %v777 = vld [vmem:[%s4] sm:$0xf]
        %v778 = vld [vmem:[%s4 + $0x4] sm:$0xf]
        %v779 = vld [vmem:[%s4 + $0x8] sm:$0xf]
        %v780 = vld [vmem:[%s4 + $0xc] sm:$0xf]
        %v781 = vld [vmem:[%s5] sm:$0x1]
        %v783 = vlaneseq
        %v784 = vshrl.u32 %v783, 7
        %v785 = vsub.s32 0, %v784
        %v786 = vrot.slane %v781, %v785
        %v792 = vunpack.c.l.b16 %v777
        %v793 = vunpack.c.l.b16 %v778
        %v794 = vunpack.c.l.b16 %v779
        %v795 = vunpack.c.l.b16 %v780
        %v796 = vpack.c.b16 %v793, %v792
        %v797 = vpack.c.b16 %v795, %v794
        %vm800 = vcmask 261120
        %v802 = vsel %vm800, %v773, 0
        %v805 = vsel %vm800, %v774, 0
        %v808 = vsel %vm800, %v775, 0
        %v811 = vsel %vm800, %v776, 0
        %813 = vmatprep.subr.bf16.mxu0 0
        %814 = vmatpush1.bf16.msra.mxu0 0
        %815 = vmatprep.subr.bf16.mxu0 0
        %816 = vmatpush1.bf16.msra.mxu0 0
        %817 = vmatprep.subr.bf16.mxu0 0
        %818 = vmatpush1.bf16.msra.mxu0 0
        %819 = vmatprep.subr.bf16.mxu0 0
        %820 = vmatpush1.bf16.msra.mxu0 0
        %821 = vmatprep.subr.bf16.mxu0 0
        %822 = vmatpush1.bf16.msra.mxu0 0
        %823 = vmatprep.subr.bf16.mxu0 0
        %824 = vmatpush1.bf16.msra.mxu0 0
        %825 = vmatprep.subr.bf16.mxu0 0
        %826 = vmatpush1.bf16.msra.mxu0 %v797
        %827 = vmatprep.subr.bf16.mxu0 0
        %828 = vmatpush1.bf16.msra.mxu0 %v796
        %829 = vmatprep.subr.bf16.mxu0 0
        %830 = vmatpush2.bf16.msra.mxu0 0
        %831 = vmatprep.subr.bf16.mxu0 0
        %832 = vmatpush2.bf16.msra.mxu0 0
        %833 = vmatprep.subr.bf16.mxu0 0
        %834 = vmatpush2.bf16.msra.mxu0 0
        %835 = vmatprep.subr.bf16.mxu0 0
        %836 = vmatpush2.bf16.msra.mxu0 0
        %837 = vmatprep.subr.bf16.mxu0 0
        %838 = vmatpush2.bf16.msra.mxu0 0
        %839 = vmatprep.subr.bf16.mxu0 0
        %840 = vmatpush2.bf16.msra.mxu0 0
        %841 = vmatprep.subr.bf16.mxu0 0
        %842 = vmatpush2.bf16.msra.mxu0 0
        %843 = vmatprep.subr.bf16.mxu0 0
        %844 = vmatpush2.bf16.msra.mxu0 0
        %845 = vmatprep.mubr.bf16.mxu0 0
        %846 = vmatmul.mubr.bf16.gmra.mxu0 %v802
        %v847 = vpop.f32.mrf.mxu0
        %v848 = vadd.f32 %v786, %v847
        %v849 = vpop.f32.mrf.mxu0
        %v850 = vpop.f32.mrf.mxu0
        %v851 = vadd.f32 %v786, %v850
        %v852 = vpop.f32.mrf.mxu0
        %853 = vmatprep.mubr.bf16.mxu0 0
        %854 = vmatmul.mubr.bf16.gmra.mxu0 %v805
        %v855 = vpop.f32.mrf.mxu0
        %v856 = vadd.f32 %v786, %v855
        %v857 = vpop.f32.mrf.mxu0
        %v858 = vpop.f32.mrf.mxu0
        %v859 = vadd.f32 %v786, %v858
        %v860 = vpop.f32.mrf.mxu0
        %861 = vmatprep.mubr.bf16.mxu0 0
        %862 = vmatmul.mubr.bf16.gmra.mxu0 %v808
        %v863 = vpop.f32.mrf.mxu0
        %v864 = vadd.f32 %v786, %v863
        %v865 = vpop.f32.mrf.mxu0
        %v866 = vpop.f32.mrf.mxu0
        %v867 = vadd.f32 %v786, %v866
        %v868 = vpop.f32.mrf.mxu0
        %869 = vmatprep.mubr.bf16.mxu0 0
        %870 = vmatmul.mubr.bf16.gmra.mxu0 %v811
        %v871 = vpop.f32.mrf.mxu0
        %v872 = vadd.f32 %v786, %v871
        %v873 = vpop.f32.mrf.mxu0
        %v874 = vpop.f32.mrf.mxu0
        %v875 = vadd.f32 %v786, %v874
        %v876 = vpop.f32.mrf.mxu0
        %877 = vdwg.mxu0
        %v878 = vmax.f32 %v848, 0.0
        %v879 = vmax.f32 %v851, 0.0
        %v880 = vmax.f32 %v856, 0.0
        %v881 = vmax.f32 %v859, 0.0
        %v882 = vmax.f32 %v864, 0.0
        %v883 = vmax.f32 %v867, 0.0
        %v884 = vmax.f32 %v872, 0.0
        %v885 = vmax.f32 %v875, 0.0
        %v886 = vld [vmem:[%s6] sm:$0xf]
        %v887 = vld [vmem:[%s6 + $0x4] sm:$0xf]
        %v888 = vld [vmem:[%s6 + $0x8] sm:$0xf]
        %v889 = vld [vmem:[%s6 + $0xc] sm:$0xf]
        %v890 = vpack.c.bf16 %v879, %v878
        %v891 = vpack.c.bf16 %v881, %v880
        %v892 = vpack.c.bf16 %v883, %v882
        %v893 = vpack.c.bf16 %v885, %v884
        %v894 = vld [vmem:[#allocation3] sm:$0x1]
        %v896 = vlaneseq
        %v897 = vshrl.u32 %v896, 7
        %v898 = vsub.s32 0, %v897
        %v899 = vrot.slane %v894, %v898
        %v905 = vunpack.c.l.b16 %v886
        %v906 = vunpack.c.l.b16 %v887
        %v907 = vunpack.c.l.b16 %v888
        %v908 = vunpack.c.l.b16 %v889
        %v909 = vpack.c.b16 %v906, %v905
        %v910 = vpack.c.b16 %v908, %v907
        %v914 = vsel %vm800, %v890, 0
        %v917 = vsel %vm800, %v891, 0
        %v920 = vsel %vm800, %v892, 0
        %v923 = vsel %vm800, %v893, 0
        %925 = vmatprep.subr.bf16.mxu0 0
        %926 = vmatpush1.bf16.msra.mxu0 0
        %927 = vmatprep.subr.bf16.mxu0 0
        %928 = vmatpush1.bf16.msra.mxu0 0
        %929 = vmatprep.subr.bf16.mxu0 0
        %930 = vmatpush1.bf16.msra.mxu0 0
        %931 = vmatprep.subr.bf16.mxu0 0
        %932 = vmatpush1.bf16.msra.mxu0 0
        %933 = vmatprep.subr.bf16.mxu0 0
        %934 = vmatpush1.bf16.msra.mxu0 0
        %935 = vmatprep.subr.bf16.mxu0 0
        %936 = vmatpush1.bf16.msra.mxu0 0
        %937 = vmatprep.subr.bf16.mxu0 0
        %938 = vmatpush1.bf16.msra.mxu0 %v910
        %939 = vmatprep.subr.bf16.mxu0 0
        %940 = vmatpush1.bf16.msra.mxu0 %v909
        %941 = vmatprep.subr.bf16.mxu0 0
        %942 = vmatpush2.bf16.msra.mxu0 0
        %943 = vmatprep.subr.bf16.mxu0 0
        %944 = vmatpush2.bf16.msra.mxu0 0
        %945 = vmatprep.subr.bf16.mxu0 0
        %946 = vmatpush2.bf16.msra.mxu0 0
        %947 = vmatprep.subr.bf16.mxu0 0
        %948 = vmatpush2.bf16.msra.mxu0 0
        %949 = vmatprep.subr.bf16.mxu0 0
        %950 = vmatpush2.bf16.msra.mxu0 0
        %951 = vmatprep.subr.bf16.mxu0 0
        %952 = vmatpush2.bf16.msra.mxu0 0
        %953 = vmatprep.subr.bf16.mxu0 0
        %954 = vmatpush2.bf16.msra.mxu0 0
        %955 = vmatprep.subr.bf16.mxu0 0
        %956 = vmatpush2.bf16.msra.mxu0 0
        %957 = vmatprep.mubr.bf16.mxu0 0
        %958 = vmatmul.mubr.bf16.gmra.mxu0 %v914
        %v959 = vpop.f32.mrf.mxu0
        %v960 = vadd.f32 %v899, %v959
        %v961 = vpop.f32.mrf.mxu0
        %v962 = vpop.f32.mrf.mxu0
        %v963 = vadd.f32 %v899, %v962
        %v964 = vpop.f32.mrf.mxu0
        %965 = vmatprep.mubr.bf16.mxu0 0
        %966 = vmatmul.mubr.bf16.gmra.mxu0 %v917
        %v967 = vpop.f32.mrf.mxu0
        %v968 = vadd.f32 %v899, %v967
        %v969 = vpop.f32.mrf.mxu0
        %v970 = vpop.f32.mrf.mxu0
        %v971 = vadd.f32 %v899, %v970
        %v972 = vpop.f32.mrf.mxu0
        %973 = vmatprep.mubr.bf16.mxu0 0
        %974 = vmatmul.mubr.bf16.gmra.mxu0 %v920
        %v975 = vpop.f32.mrf.mxu0
        %v976 = vadd.f32 %v899, %v975
        %v977 = vpop.f32.mrf.mxu0
        %v978 = vpop.f32.mrf.mxu0
        %v979 = vadd.f32 %v899, %v978
        %v980 = vpop.f32.mrf.mxu0
        %981 = vmatprep.mubr.bf16.mxu0 0
        %982 = vmatmul.mubr.bf16.gmra.mxu0 %v923
        %v983 = vpop.f32.mrf.mxu0
        %v984 = vadd.f32 %v899, %v983
        %v985 = vpop.f32.mrf.mxu0
        %v986 = vpop.f32.mrf.mxu0
        %v987 = vadd.f32 %v899, %v986
        %v988 = vpop.f32.mrf.mxu0
        %989 = vdwg.mxu0
        %v990 = vld [vmem:[%s2] sm:$0xff]
        %v991 = vld [vmem:[%s2 + $0x8] sm:$0xff]
        %v992 = vld [vmem:[%s2 + $0x10] sm:$0xff]
        %v993 = vld [vmem:[%s2 + $0x18] sm:$0xff]
        %v994 = vld [vmem:[%s2 + $0x20] sm:$0xff]
        %v995 = vld [vmem:[%s2 + $0x28] sm:$0xff]
        %v996 = vld [vmem:[%s2 + $0x30] sm:$0xff]
        %v997 = vld [vmem:[%s2 + $0x38] sm:$0xff]
        %v998 = vld [vmem:[#allocation6] sm:$0xf]
        %v999 = vld [vmem:[#allocation6 + $0x4] sm:$0xf]
        %v1000 = vld [vmem:[#allocation6 + $0x8] sm:$0xf]
        %v1001 = vld [vmem:[#allocation6 + $0xc] sm:$0xf]
        %v1006 = vunpack.c.l.b16 %v998
        %v1007 = vunpack.c.l.b16 %v999
        %v1008 = vunpack.c.l.b16 %v1000
        %v1009 = vunpack.c.l.b16 %v1001
        %v1010 = vpack.c.b16 %v1007, %v1006
        %v1011 = vpack.c.b16 %v1009, %v1008
        %1014 = vmatprep.subr.bf16.mxu0 0
        %1015 = vmatpush1.bf16.msra.mxu0 0
        %1016 = vmatprep.subr.bf16.mxu0 0
        %1017 = vmatpush1.bf16.msra.mxu0 0
        %1018 = vmatprep.subr.bf16.mxu0 0
        %1019 = vmatpush1.bf16.msra.mxu0 0
        %1020 = vmatprep.subr.bf16.mxu0 0
        %1021 = vmatpush1.bf16.msra.mxu0 0
        %1022 = vmatprep.subr.bf16.mxu0 0
        %1023 = vmatpush1.bf16.msra.mxu0 0
        %1024 = vmatprep.subr.bf16.mxu0 0
        %1025 = vmatpush1.bf16.msra.mxu0 0
        %1026 = vmatprep.subr.bf16.mxu0 0
        %1027 = vmatpush1.bf16.msra.mxu0 %v1011
        %1028 = vmatprep.subr.bf16.mxu0 0
        %1029 = vmatpush1.bf16.msra.mxu0 %v1010
        %1030 = vmatprep.subr.bf16.mxu0 0
        %1031 = vmatpush2.bf16.msra.mxu0 0
        %1032 = vmatprep.subr.bf16.mxu0 0
        %1033 = vmatpush2.bf16.msra.mxu0 0
        %1034 = vmatprep.subr.bf16.mxu0 0
        %1035 = vmatpush2.bf16.msra.mxu0 0
        %1036 = vmatprep.subr.bf16.mxu0 0
        %1037 = vmatpush2.bf16.msra.mxu0 0
        %1038 = vmatprep.subr.bf16.mxu0 0
        %1039 = vmatpush2.bf16.msra.mxu0 0
        %1040 = vmatprep.subr.bf16.mxu0 0
        %1041 = vmatpush2.bf16.msra.mxu0 0
        %1042 = vmatprep.subr.bf16.mxu0 0
        %1043 = vmatpush2.bf16.msra.mxu0 0
        %1044 = vmatprep.subr.bf16.mxu0 0
        %1045 = vmatpush2.bf16.msra.mxu0 0
        %1046 = vmatprep.mubr.bf16.mxu0 0
        %1047 = vmatmul.mubr.bf16.gmra.mxu0 %v802
        %v1048 = vpop.f32.mrf.mxu0
        %v1049 = vadd.f32 0.0, %v1048
        %v1050 = vpop.f32.mrf.mxu0
        %v1051 = vpop.f32.mrf.mxu0
        %v1052 = vadd.f32 0.0, %v1051
        %v1053 = vpop.f32.mrf.mxu0
        %1054 = vmatprep.mubr.bf16.mxu0 0
        %1055 = vmatmul.mubr.bf16.gmra.mxu0 %v805
        %v1056 = vpop.f32.mrf.mxu0
        %v1057 = vadd.f32 0.0, %v1056
        %v1058 = vpop.f32.mrf.mxu0
        %v1059 = vpop.f32.mrf.mxu0
        %v1060 = vadd.f32 0.0, %v1059
        %v1061 = vpop.f32.mrf.mxu0
        %1062 = vmatprep.mubr.bf16.mxu0 0
        %1063 = vmatmul.mubr.bf16.gmra.mxu0 %v808
        %v1064 = vpop.f32.mrf.mxu0
        %v1065 = vadd.f32 0.0, %v1064
        %v1066 = vpop.f32.mrf.mxu0
        %v1067 = vpop.f32.mrf.mxu0
        %v1068 = vadd.f32 0.0, %v1067
        %v1069 = vpop.f32.mrf.mxu0
        %1070 = vmatprep.mubr.bf16.mxu0 0
        %1071 = vmatmul.mubr.bf16.gmra.mxu0 %v811
        %v1072 = vpop.f32.mrf.mxu0
        %v1073 = vadd.f32 0.0, %v1072
        %v1074 = vpop.f32.mrf.mxu0
        %v1075 = vpop.f32.mrf.mxu0
        %v1076 = vadd.f32 0.0, %v1075
        %v1077 = vpop.f32.mrf.mxu0
        %1078 = vdwg.mxu0
        %v1079 = vadd.f32 %v990, %v1049
        %v1080 = vadd.f32 %v991, %v1052
        %v1081 = vadd.f32 %v992, %v1057
        %v1082 = vadd.f32 %v993, %v1060
        %v1083 = vadd.f32 %v994, %v1065
        %v1084 = vadd.f32 %v995, %v1068
        %v1085 = vadd.f32 %v996, %v1073
        %v1086 = vadd.f32 %v997, %v1076
        %v1087 = vld [vmem:[#allocation8] sm:$0x1]
        %v1089 = vlaneseq
        %v1090 = vshrl.u32 %v1089, 7
        %v1091 = vsub.s32 0, %v1090
        %v1092 = vrot.slane %v1087, %v1091
        %v1102 = vunpack.c.l.b16 %v757
        %v1103 = vunpack.c.l.b16 %v758
        %v1104 = vunpack.c.l.b16 %v759
        %v1105 = vunpack.c.l.b16 %v760
        %v1106 = vunpack.c.l.b16 %v761
        %v1107 = vunpack.c.l.b16 %v762
        %v1108 = vunpack.c.l.b16 %v763
        %v1109 = vunpack.c.l.b16 %v764
        %v1110 = vpack.c.b16 %v1103, %v1102
        %v1111 = vpack.c.b16 %v1105, %v1104
        %v1112 = vpack.c.b16 %v1107, %v1106
        %v1113 = vpack.c.b16 %v1109, %v1108
        %vm1114 = vcmask 523264
        %v1116 = vsel %vm1114, %v1110, 0
        %v1119 = vsel %vm1114, %v1111, 0
        %v1122 = vsel %vm1114, %v1112, 0
        %v1125 = vsel %vm1114, %v1113, 0
        %1127 = vmatprep.subr.mxu0 0.0
        %1128 = vmatpush1.msra.mxu0 0.0
        %1129 = vmatprep.subr.mxu0 0.0
        %1130 = vmatpush1.msra.mxu0 0.0
        %1131 = vmatprep.subr.mxu0 0.0
        %1132 = vmatpush1.msra.mxu0 0.0
        %1133 = vmatprep.subr.mxu0 0.0
        %1134 = vmatpush1.msra.mxu0 0.0
        %1135 = vmatprep.subr.mxu0 0.0
        %1136 = vmatpush1.msra.mxu0 0.0
        %1137 = vmatprep.subr.mxu0 0.0
        %1138 = vmatpush1.msra.mxu0 0.0
        %1139 = vmatprep.subr.mxu0 0.0
        %1140 = vmatpush1.msra.mxu0 0.0
        %1141 = vmatprep.subr.mxu0 0.0
        %1142 = vmatpush1.msra.mxu0 0.0
        %1143 = vmatprep.subr.mxu0 0.0
        %1144 = vmatpush1.msra.mxu0 %v1086
        %1145 = vmatprep.subr.mxu0 0.0
        %1146 = vmatpush1.msra.mxu0 %v1085
        %1147 = vmatprep.subr.mxu0 0.0
        %1148 = vmatpush1.msra.mxu0 %v1084
        %1149 = vmatprep.subr.mxu0 0.0
        %1150 = vmatpush1.msra.mxu0 %v1083
        %1151 = vmatprep.subr.mxu0 0.0
        %1152 = vmatpush1.msra.mxu0 %v1082
        %1153 = vmatprep.subr.mxu0 0.0
        %1154 = vmatpush1.msra.mxu0 %v1081
        %1155 = vmatprep.subr.mxu0 0.0
        %1156 = vmatpush1.msra.mxu0 %v1080
        %1157 = vmatprep.subr.mxu0 0.0
        %1158 = vmatpush1.msra.mxu0 %v1079
        %1159 = vmatprep.subr.mxu0 0.0
        %1160 = vmatpush2.msra.mxu0 0.0
        %1161 = vmatprep.subr.mxu0 0.0
        %1162 = vmatpush2.msra.mxu0 0.0
        %1163 = vmatprep.subr.mxu0 0.0
        %1164 = vmatpush2.msra.mxu0 0.0
        %1165 = vmatprep.subr.mxu0 0.0
        %1166 = vmatpush2.msra.mxu0 0.0
        %1167 = vmatprep.subr.mxu0 0.0
        %1168 = vmatpush2.msra.mxu0 0.0
        %1169 = vmatprep.subr.mxu0 0.0
        %1170 = vmatpush2.msra.mxu0 0.0
        %1171 = vmatprep.subr.mxu0 0.0
        %1172 = vmatpush2.msra.mxu0 0.0
        %1173 = vmatprep.subr.mxu0 0.0
        %1174 = vmatpush2.msra.mxu0 0.0
        %1175 = vmatprep.subr.mxu0 0.0
        %1176 = vmatpush2.msra.mxu0 0.0
        %1177 = vmatprep.subr.mxu0 0.0
        %1178 = vmatpush2.msra.mxu0 0.0
        %1179 = vmatprep.subr.mxu0 0.0
        %1180 = vmatpush2.msra.mxu0 0.0
        %1181 = vmatprep.subr.mxu0 0.0
        %1182 = vmatpush2.msra.mxu0 0.0
        %1183 = vmatprep.subr.mxu0 0.0
        %1184 = vmatpush2.msra.mxu0 0.0
        %1185 = vmatprep.subr.mxu0 0.0
        %1186 = vmatpush2.msra.mxu0 0.0
        %1187 = vmatprep.subr.mxu0 0.0
        %1188 = vmatpush2.msra.mxu0 0.0
        %1189 = vmatprep.subr.mxu0 0.0
        %1190 = vmatpush2.msra.mxu0 0.0
        %1191 = vmatprep.mubr.bf16.mxu0 0
        %1192 = vmatmul.mubr.bf16.gmra.mxu0 %v1116
        %v1193 = vpop.f32.mrf.mxu0
        %v1194 = vadd.f32 %v1092, %v1193
        %v1195 = vpop.f32.mrf.mxu0
        %v1196 = vpop.f32.mrf.mxu0
        %v1197 = vadd.f32 %v1092, %v1196
        %v1198 = vpop.f32.mrf.mxu0
        %1199 = vmatprep.mubr.bf16.mxu0 0
        %1200 = vmatmul.mubr.bf16.gmra.mxu0 %v1119
        %v1201 = vpop.f32.mrf.mxu0
        %v1202 = vadd.f32 %v1092, %v1201
        %v1203 = vpop.f32.mrf.mxu0
        %v1204 = vpop.f32.mrf.mxu0
        %v1205 = vadd.f32 %v1092, %v1204
        %v1206 = vpop.f32.mrf.mxu0
        %1207 = vmatprep.mubr.bf16.mxu0 0
        %1208 = vmatmul.mubr.bf16.gmra.mxu0 %v1122
        %v1209 = vpop.f32.mrf.mxu0
        %v1210 = vadd.f32 %v1092, %v1209
        %v1211 = vpop.f32.mrf.mxu0
        %v1212 = vpop.f32.mrf.mxu0
        %v1213 = vadd.f32 %v1092, %v1212
        %v1214 = vpop.f32.mrf.mxu0
        %1215 = vmatprep.mubr.bf16.mxu0 0
        %1216 = vmatmul.mubr.bf16.gmra.mxu0 %v1125
        %v1217 = vpop.f32.mrf.mxu0
        %v1218 = vadd.f32 %v1092, %v1217
        %v1219 = vpop.f32.mrf.mxu0
        %v1220 = vpop.f32.mrf.mxu0
        %v1221 = vadd.f32 %v1092, %v1220
        %v1222 = vpop.f32.mrf.mxu0
        %1223 = vdwg.mxu0
        %v1224 = vmax.f32 %v1194, 0.0
        %v1225 = vmax.f32 %v1197, 0.0
        %v1226 = vmax.f32 %v1202, 0.0
        %v1227 = vmax.f32 %v1205, 0.0
        %v1228 = vmax.f32 %v1210, 0.0
        %v1229 = vmax.f32 %v1213, 0.0
        %v1230 = vmax.f32 %v1218, 0.0
        %v1231 = vmax.f32 %v1221, 0.0
        %v1232 = vld [vmem:[%s10] sm:$0xf]
        %v1233 = vld [vmem:[%s10 + $0x4] sm:$0xf]
        %v1234 = vld [vmem:[%s10 + $0x8] sm:$0xf]
        %v1235 = vld [vmem:[%s10 + $0xc] sm:$0xf]
        %v1236 = vpack.c.bf16 %v1225, %v1224
        %v1237 = vpack.c.bf16 %v1227, %v1226
        %v1238 = vpack.c.bf16 %v1229, %v1228
        %v1239 = vpack.c.bf16 %v1231, %v1230
        %v1244 = vunpack.c.l.b16 %v1232
        %v1245 = vunpack.c.l.b16 %v1233
        %v1246 = vunpack.c.l.b16 %v1234
        %v1247 = vunpack.c.l.b16 %v1235
        %v1248 = vpack.c.b16 %v1245, %v1244
        %v1249 = vpack.c.b16 %v1247, %v1246
        %v1253 = vsel %vm800, %v1236, 0
        %v1256 = vsel %vm800, %v1237, 0
        %v1259 = vsel %vm800, %v1238, 0
        %v1262 = vsel %vm800, %v1239, 0
        %1264 = vmatprep.subr.bf16.mxu0 0
        %1265 = vmatpush1.bf16.msra.mxu0 0
        %1266 = vmatprep.subr.bf16.mxu0 0
        %1267 = vmatpush1.bf16.msra.mxu0 0
        %1268 = vmatprep.subr.bf16.mxu0 0
        %1269 = vmatpush1.bf16.msra.mxu0 0
        %1270 = vmatprep.subr.bf16.mxu0 0
        %1271 = vmatpush1.bf16.msra.mxu0 0
        %1272 = vmatprep.subr.bf16.mxu0 0
        %1273 = vmatpush1.bf16.msra.mxu0 0
        %1274 = vmatprep.subr.bf16.mxu0 0
        %1275 = vmatpush1.bf16.msra.mxu0 0
        %1276 = vmatprep.subr.bf16.mxu0 0
        %1277 = vmatpush1.bf16.msra.mxu0 %v1249
        %1278 = vmatprep.subr.bf16.mxu0 0
        %1279 = vmatpush1.bf16.msra.mxu0 %v1248
        %1280 = vmatprep.subr.bf16.mxu0 0
        %1281 = vmatpush2.bf16.msra.mxu0 0
        %1282 = vmatprep.subr.bf16.mxu0 0
        %1283 = vmatpush2.bf16.msra.mxu0 0
        %1284 = vmatprep.subr.bf16.mxu0 0
        %1285 = vmatpush2.bf16.msra.mxu0 0
        %1286 = vmatprep.subr.bf16.mxu0 0
        %1287 = vmatpush2.bf16.msra.mxu0 0
        %1288 = vmatprep.subr.bf16.mxu0 0
        %1289 = vmatpush2.bf16.msra.mxu0 0
        %1290 = vmatprep.subr.bf16.mxu0 0
        %1291 = vmatpush2.bf16.msra.mxu0 0
        %1292 = vmatprep.subr.bf16.mxu0 0
        %1293 = vmatpush2.bf16.msra.mxu0 0
        %1294 = vmatprep.subr.bf16.mxu0 0
        %1295 = vmatpush2.bf16.msra.mxu0 0
        %1296 = vmatprep.mubr.bf16.mxu0 0
        %1297 = vmatmul.mubr.bf16.gmra.mxu0 %v1253
        %v1298 = vpop.f32.mrf.mxu0
        %v1299 = vadd.f32 0.0, %v1298
        %v1300 = vpop.f32.mrf.mxu0
        %v1301 = vpop.f32.mrf.mxu0
        %v1302 = vadd.f32 0.0, %v1301
        %v1303 = vpop.f32.mrf.mxu0
        %1304 = vmatprep.mubr.bf16.mxu0 0
        %1305 = vmatmul.mubr.bf16.gmra.mxu0 %v1256
        %v1306 = vpop.f32.mrf.mxu0
        %v1307 = vadd.f32 0.0, %v1306
        %v1308 = vpop.f32.mrf.mxu0
        %v1309 = vpop.f32.mrf.mxu0
        %v1310 = vadd.f32 0.0, %v1309
        %v1311 = vpop.f32.mrf.mxu0
        %1312 = vmatprep.mubr.bf16.mxu0 0
        %1313 = vmatmul.mubr.bf16.gmra.mxu0 %v1259
        %v1314 = vpop.f32.mrf.mxu0
        %v1315 = vadd.f32 0.0, %v1314
        %v1316 = vpop.f32.mrf.mxu0
        %v1317 = vpop.f32.mrf.mxu0
        %v1318 = vadd.f32 0.0, %v1317
        %v1319 = vpop.f32.mrf.mxu0
        %1320 = vmatprep.mubr.bf16.mxu0 0
        %1321 = vmatmul.mubr.bf16.gmra.mxu0 %v1262
        %v1322 = vpop.f32.mrf.mxu0
        %v1323 = vadd.f32 0.0, %v1322
        %v1324 = vpop.f32.mrf.mxu0
        %v1325 = vpop.f32.mrf.mxu0
        %v1326 = vadd.f32 0.0, %v1325
        %v1327 = vpop.f32.mrf.mxu0
        %1328 = vdwg.mxu0
        %v1329 = vld [vmem:[#allocation9] sm:$0x1]
        %v1331 = vlaneseq
        %v1332 = vshrl.u32 %v1331, 7
        %v1333 = vsub.s32 0, %v1332
        %v1334 = vrot.slane %v1329, %v1333
        %1336 = vmatprep.subr.mxu0 0.0
        %1337 = vmatpush1.msra.mxu0 0.0
        %1338 = vmatprep.subr.mxu0 0.0
        %1339 = vmatpush1.msra.mxu0 0.0
        %1340 = vmatprep.subr.mxu0 0.0
        %1341 = vmatpush1.msra.mxu0 0.0
        %1342 = vmatprep.subr.mxu0 0.0
        %1343 = vmatpush1.msra.mxu0 0.0
        %1344 = vmatprep.subr.mxu0 0.0
        %1345 = vmatpush1.msra.mxu0 0.0
        %1346 = vmatprep.subr.mxu0 0.0
        %1347 = vmatpush1.msra.mxu0 0.0
        %1348 = vmatprep.subr.mxu0 0.0
        %1349 = vmatpush1.msra.mxu0 0.0
        %1350 = vmatprep.subr.mxu0 0.0
        %1351 = vmatpush1.msra.mxu0 0.0
        %1352 = vmatprep.subr.mxu0 0.0
        %1353 = vmatpush1.msra.mxu0 %v1326
        %1354 = vmatprep.subr.mxu0 0.0
        %1355 = vmatpush1.msra.mxu0 %v1323
        %1356 = vmatprep.subr.mxu0 0.0
        %1357 = vmatpush1.msra.mxu0 %v1318
        %1358 = vmatprep.subr.mxu0 0.0
        %1359 = vmatpush1.msra.mxu0 %v1315
        %1360 = vmatprep.subr.mxu0 0.0
        %1361 = vmatpush1.msra.mxu0 %v1310
        %1362 = vmatprep.subr.mxu0 0.0
        %1363 = vmatpush1.msra.mxu0 %v1307
        %1364 = vmatprep.subr.mxu0 0.0
        %1365 = vmatpush1.msra.mxu0 %v1302
        %1366 = vmatprep.subr.mxu0 0.0
        %1367 = vmatpush1.msra.mxu0 %v1299
        %1368 = vmatprep.subr.mxu0 0.0
        %1369 = vmatpush2.msra.mxu0 0.0
        %1370 = vmatprep.subr.mxu0 0.0
        %1371 = vmatpush2.msra.mxu0 0.0
        %1372 = vmatprep.subr.mxu0 0.0
        %1373 = vmatpush2.msra.mxu0 0.0
        %1374 = vmatprep.subr.mxu0 0.0
        %1375 = vmatpush2.msra.mxu0 0.0
        %1376 = vmatprep.subr.mxu0 0.0
        %1377 = vmatpush2.msra.mxu0 0.0
        %1378 = vmatprep.subr.mxu0 0.0
        %1379 = vmatpush2.msra.mxu0 0.0
        %1380 = vmatprep.subr.mxu0 0.0
        %1381 = vmatpush2.msra.mxu0 0.0
        %1382 = vmatprep.subr.mxu0 0.0
        %1383 = vmatpush2.msra.mxu0 0.0
        %1384 = vmatprep.subr.mxu0 0.0
        %1385 = vmatpush2.msra.mxu0 0.0
        %1386 = vmatprep.subr.mxu0 0.0
        %1387 = vmatpush2.msra.mxu0 0.0
        %1388 = vmatprep.subr.mxu0 0.0
        %1389 = vmatpush2.msra.mxu0 0.0
        %1390 = vmatprep.subr.mxu0 0.0
        %1391 = vmatpush2.msra.mxu0 0.0
        %1392 = vmatprep.subr.mxu0 0.0
        %1393 = vmatpush2.msra.mxu0 0.0
        %1394 = vmatprep.subr.mxu0 0.0
        %1395 = vmatpush2.msra.mxu0 0.0
        %1396 = vmatprep.subr.mxu0 0.0
        %1397 = vmatpush2.msra.mxu0 0.0
        %1398 = vmatprep.subr.mxu0 0.0
        %1399 = vmatpush2.msra.mxu0 0.0
        %1400 = vmatprep.mubr.bf16.mxu0 0
        %1401 = vmatmul.mubr.bf16.gmra.mxu0 %v1116
        %v1402 = vpop.f32.mrf.mxu0
        %v1403 = vadd.f32 %v1334, %v1402
        %v1404 = vpop.f32.mrf.mxu0
        %v1405 = vpop.f32.mrf.mxu0
        %v1406 = vadd.f32 %v1334, %v1405
        %v1407 = vpop.f32.mrf.mxu0
        %1408 = vmatprep.mubr.bf16.mxu0 0
        %1409 = vmatmul.mubr.bf16.gmra.mxu0 %v1119
        %v1410 = vpop.f32.mrf.mxu0
        %v1411 = vadd.f32 %v1334, %v1410
        %v1412 = vpop.f32.mrf.mxu0
        %v1413 = vpop.f32.mrf.mxu0
        %v1414 = vadd.f32 %v1334, %v1413
        %v1415 = vpop.f32.mrf.mxu0
        %1416 = vmatprep.mubr.bf16.mxu0 0
        %1417 = vmatmul.mubr.bf16.gmra.mxu0 %v1122
        %v1418 = vpop.f32.mrf.mxu0
        %v1419 = vadd.f32 %v1334, %v1418
        %v1420 = vpop.f32.mrf.mxu0
        %v1421 = vpop.f32.mrf.mxu0
        %v1422 = vadd.f32 %v1334, %v1421
        %v1423 = vpop.f32.mrf.mxu0
        %1424 = vmatprep.mubr.bf16.mxu0 0
        %1425 = vmatmul.mubr.bf16.gmra.mxu0 %v1125
        %v1426 = vpop.f32.mrf.mxu0
        %v1427 = vadd.f32 %v1334, %v1426
        %v1428 = vpop.f32.mrf.mxu0
        %v1429 = vpop.f32.mrf.mxu0
        %v1430 = vadd.f32 %v1334, %v1429
        %v1431 = vpop.f32.mrf.mxu0
        %1432 = vdwg.mxu0
        %v1433 = vld [vmem:[#allocation11] sm:$0xf]
        %v1434 = vld [vmem:[#allocation11 + $0x4] sm:$0xf]
        %v1435 = vpack.c.bf16 %v1406, %v1403
        %v1436 = vpack.c.bf16 %v1414, %v1411
        %v1437 = vpack.c.bf16 %v1422, %v1419
        %v1438 = vpack.c.bf16 %v1430, %v1427
        %v1439 = vld [vmem:[#allocation12] sm:$0x1]
        %v1441 = vlaneseq
        %v1442 = vshrl.u32 %v1441, 7
        %v1443 = vsub.s32 0, %v1442
        %v1444 = vrot.slane %v1439, %v1443
        %v1448 = vunpack.c.l.b16 %v1433
        %v1449 = vunpack.c.l.b16 %v1434
        %v1450 = vpack.c.b16 %v1449, %v1448
        %vm1452 = vcmask 130048
        %v1454 = vsel %vm1452, %v1435, 0
        %v1457 = vsel %vm1452, %v1436, 0
        %v1460 = vsel %vm1452, %v1437, 0
        %v1463 = vsel %vm1452, %v1438, 0
        %1465 = vmatprep.subr.bf16.mxu0 0
        %1466 = vmatpush1.bf16.msra.mxu0 0
        %1467 = vmatprep.subr.bf16.mxu0 0
        %1468 = vmatpush1.bf16.msra.mxu0 0
        %1469 = vmatprep.subr.bf16.mxu0 0
        %1470 = vmatpush1.bf16.msra.mxu0 0
        %1471 = vmatprep.subr.bf16.mxu0 0
        %1472 = vmatpush1.bf16.msra.mxu0 0
        %1473 = vmatprep.subr.bf16.mxu0 0
        %1474 = vmatpush1.bf16.msra.mxu0 0
        %1475 = vmatprep.subr.bf16.mxu0 0
        %1476 = vmatpush1.bf16.msra.mxu0 0
        %1477 = vmatprep.subr.bf16.mxu0 0
        %1478 = vmatpush1.bf16.msra.mxu0 0
        %1479 = vmatprep.subr.bf16.mxu0 0
        %1480 = vmatpush1.bf16.msra.mxu0 %v1450
        %1481 = vmatprep.subr.bf16.mxu0 0
        %1482 = vmatpush2.bf16.msra.mxu0 0
        %1483 = vmatprep.subr.bf16.mxu0 0
        %1484 = vmatpush2.bf16.msra.mxu0 0
        %1485 = vmatprep.subr.bf16.mxu0 0
        %1486 = vmatpush2.bf16.msra.mxu0 0
        %1487 = vmatprep.subr.bf16.mxu0 0
        %1488 = vmatpush2.bf16.msra.mxu0 0
        %1489 = vmatprep.subr.bf16.mxu0 0
        %1490 = vmatpush2.bf16.msra.mxu0 0
        %1491 = vmatprep.subr.bf16.mxu0 0
        %1492 = vmatpush2.bf16.msra.mxu0 0
        %1493 = vmatprep.subr.bf16.mxu0 0
        %1494 = vmatpush2.bf16.msra.mxu0 0
        %1495 = vmatprep.subr.bf16.mxu0 0
        %1496 = vmatpush2.bf16.msra.mxu0 0
        %1497 = vmatprep.mubr.bf16.mxu0 0
        %1498 = vmatmul.mubr.bf16.gmra.mxu0 %v1454
        %v1499 = vpop.f32.mrf.mxu0
        %v1500 = vadd.f32 %v1444, %v1499
        %v1501 = vpop.f32.mrf.mxu0
        %v1502 = vpop.f32.mrf.mxu0
        %v1503 = vadd.f32 %v1444, %v1502
        %v1504 = vpop.f32.mrf.mxu0
        %1505 = vmatprep.mubr.bf16.mxu0 0
        %1506 = vmatmul.mubr.bf16.gmra.mxu0 %v1457
        %v1507 = vpop.f32.mrf.mxu0
        %v1508 = vadd.f32 %v1444, %v1507
        %v1509 = vpop.f32.mrf.mxu0
        %v1510 = vpop.f32.mrf.mxu0
        %v1511 = vadd.f32 %v1444, %v1510
        %v1512 = vpop.f32.mrf.mxu0
        %1513 = vmatprep.mubr.bf16.mxu0 0
        %1514 = vmatmul.mubr.bf16.gmra.mxu0 %v1460
        %v1515 = vpop.f32.mrf.mxu0
        %v1516 = vadd.f32 %v1444, %v1515
        %v1517 = vpop.f32.mrf.mxu0
        %v1518 = vpop.f32.mrf.mxu0
        %v1519 = vadd.f32 %v1444, %v1518
        %v1520 = vpop.f32.mrf.mxu0
        %1521 = vmatprep.mubr.bf16.mxu0 0
        %1522 = vmatmul.mubr.bf16.gmra.mxu0 %v1463
        %v1523 = vpop.f32.mrf.mxu0
        %v1524 = vadd.f32 %v1444, %v1523
        %v1525 = vpop.f32.mrf.mxu0
        %v1526 = vpop.f32.mrf.mxu0
        %v1527 = vadd.f32 %v1444, %v1526
        %v1528 = vpop.f32.mrf.mxu0
        %1529 = vdwg.mxu0
        %v1530 = vmax.f32 %v1500, 0.0
        %v1531 = vmax.f32 %v1503, 0.0
        %v1532 = vmax.f32 %v1508, 0.0
        %v1533 = vmax.f32 %v1511, 0.0
        %v1534 = vmax.f32 %v1516, 0.0
        %v1535 = vmax.f32 %v1519, 0.0
        %v1536 = vmax.f32 %v1524, 0.0
        %v1537 = vmax.f32 %v1527, 0.0
        %v1538 = vld [vmem:[%s3] sm:$0xff]
        %v1539 = vld [vmem:[%s3 + $0x8] sm:$0xff]
        %v1540 = vld [vmem:[%s3 + $0x10] sm:$0xff]
        %v1541 = vld [vmem:[%s3 + $0x18] sm:$0xff]
        %v1542 = vld [vmem:[%s3 + $0x20] sm:$0xff]
        %v1543 = vld [vmem:[%s3 + $0x28] sm:$0xff]
        %v1544 = vld [vmem:[%s3 + $0x30] sm:$0xff]
        %v1545 = vld [vmem:[%s3 + $0x38] sm:$0xff]
        %v1546 = vld [vmem:[%s14] sm:$0xf]
        %v1547 = vld [vmem:[%s14 + $0x4] sm:$0xf]
        %v1548 = vld [vmem:[%s14 + $0x8] sm:$0xf]
        %v1549 = vld [vmem:[%s14 + $0xc] sm:$0xf]
        %v1550 = vpack.c.bf16 %v1531, %v1530
        %v1551 = vpack.c.bf16 %v1533, %v1532
        %v1552 = vpack.c.bf16 %v1535, %v1534
        %v1553 = vpack.c.bf16 %v1537, %v1536
        %v1558 = vunpack.c.l.b16 %v1546
        %v1559 = vunpack.c.l.b16 %v1547
        %v1560 = vunpack.c.l.b16 %v1548
        %v1561 = vunpack.c.l.b16 %v1549
        %v1562 = vpack.c.b16 %v1559, %v1558
        %v1563 = vpack.c.b16 %v1561, %v1560
        %v1567 = vsel %vm800, %v1550, 0
        %v1570 = vsel %vm800, %v1551, 0
        %v1573 = vsel %vm800, %v1552, 0
        %v1576 = vsel %vm800, %v1553, 0
        %1578 = vmatprep.subr.bf16.mxu0 0
        %1579 = vmatpush1.bf16.msra.mxu0 0
        %1580 = vmatprep.subr.bf16.mxu0 0
        %1581 = vmatpush1.bf16.msra.mxu0 0
        %1582 = vmatprep.subr.bf16.mxu0 0
        %1583 = vmatpush1.bf16.msra.mxu0 0
        %1584 = vmatprep.subr.bf16.mxu0 0
        %1585 = vmatpush1.bf16.msra.mxu0 0
        %1586 = vmatprep.subr.bf16.mxu0 0
        %1587 = vmatpush1.bf16.msra.mxu0 0
        %1588 = vmatprep.subr.bf16.mxu0 0
        %1589 = vmatpush1.bf16.msra.mxu0 0
        %1590 = vmatprep.subr.bf16.mxu0 0
        %1591 = vmatpush1.bf16.msra.mxu0 %v1563
        %1592 = vmatprep.subr.bf16.mxu0 0
        %1593 = vmatpush1.bf16.msra.mxu0 %v1562
        %1594 = vmatprep.subr.bf16.mxu0 0
        %1595 = vmatpush2.bf16.msra.mxu0 0
        %1596 = vmatprep.subr.bf16.mxu0 0
        %1597 = vmatpush2.bf16.msra.mxu0 0
        %1598 = vmatprep.subr.bf16.mxu0 0
        %1599 = vmatpush2.bf16.msra.mxu0 0
        %1600 = vmatprep.subr.bf16.mxu0 0
        %1601 = vmatpush2.bf16.msra.mxu0 0
        %1602 = vmatprep.subr.bf16.mxu0 0
        %1603 = vmatpush2.bf16.msra.mxu0 0
        %1604 = vmatprep.subr.bf16.mxu0 0
        %1605 = vmatpush2.bf16.msra.mxu0 0
        %1606 = vmatprep.subr.bf16.mxu0 0
        %1607 = vmatpush2.bf16.msra.mxu0 0
        %1608 = vmatprep.subr.bf16.mxu0 0
        %1609 = vmatpush2.bf16.msra.mxu0 0
        %1610 = vmatprep.mubr.bf16.mxu0 0
        %1611 = vmatmul.mubr.bf16.gmra.mxu0 %v1567
        %v1612 = vpop.f32.mrf.mxu0
        %v1613 = vadd.f32 0.0, %v1612
        %v1614 = vpop.f32.mrf.mxu0
        %v1615 = vpop.f32.mrf.mxu0
        %v1616 = vadd.f32 0.0, %v1615
        %v1617 = vpop.f32.mrf.mxu0
        %1618 = vmatprep.mubr.bf16.mxu0 0
        %1619 = vmatmul.mubr.bf16.gmra.mxu0 %v1570
        %v1620 = vpop.f32.mrf.mxu0
        %v1621 = vadd.f32 0.0, %v1620
        %v1622 = vpop.f32.mrf.mxu0
        %v1623 = vpop.f32.mrf.mxu0
        %v1624 = vadd.f32 0.0, %v1623
        %v1625 = vpop.f32.mrf.mxu0
        %1626 = vmatprep.mubr.bf16.mxu0 0
        %1627 = vmatmul.mubr.bf16.gmra.mxu0 %v1573
        %v1628 = vpop.f32.mrf.mxu0
        %v1629 = vadd.f32 0.0, %v1628
        %v1630 = vpop.f32.mrf.mxu0
        %v1631 = vpop.f32.mrf.mxu0
        %v1632 = vadd.f32 0.0, %v1631
        %v1633 = vpop.f32.mrf.mxu0
        %1634 = vmatprep.mubr.bf16.mxu0 0
        %1635 = vmatmul.mubr.bf16.gmra.mxu0 %v1576
        %v1636 = vpop.f32.mrf.mxu0
        %v1637 = vadd.f32 0.0, %v1636
        %v1638 = vpop.f32.mrf.mxu0
        %v1639 = vpop.f32.mrf.mxu0
        %v1640 = vadd.f32 0.0, %v1639
        %v1641 = vpop.f32.mrf.mxu0
        %1642 = vdwg.mxu0
        %v1643 = vadd.f32 %v1538, %v1613
        %v1644 = vadd.f32 %v1539, %v1616
        %v1645 = vadd.f32 %v1540, %v1621
        %v1646 = vadd.f32 %v1541, %v1624
        %v1647 = vadd.f32 %v1542, %v1629
        %v1648 = vadd.f32 %v1543, %v1632
        %v1649 = vadd.f32 %v1544, %v1637
        %v1650 = vadd.f32 %v1545, %v1640
        %v1651 = vld [vmem:[#allocation14] sm:$0xf]
        %v1652 = vld [vmem:[#allocation14 + $0x4] sm:$0xf]
        %v1653 = vld [vmem:[#allocation14 + $0x8] sm:$0xf]
        %v1654 = vld [vmem:[#allocation14 + $0xc] sm:$0xf]
        %v1659 = vunpack.c.l.b16 %v1651
        %v1660 = vunpack.c.l.b16 %v1652
        %v1661 = vunpack.c.l.b16 %v1653
        %v1662 = vunpack.c.l.b16 %v1654
        %v1663 = vpack.c.b16 %v1660, %v1659
        %v1664 = vpack.c.b16 %v1662, %v1661
        %1667 = vmatprep.subr.bf16.mxu0 0
        %1668 = vmatpush1.bf16.msra.mxu0 0
        %1669 = vmatprep.subr.bf16.mxu0 0
        %1670 = vmatpush1.bf16.msra.mxu0 0
        %1671 = vmatprep.subr.bf16.mxu0 0
        %1672 = vmatpush1.bf16.msra.mxu0 0
        %1673 = vmatprep.subr.bf16.mxu0 0
        %1674 = vmatpush1.bf16.msra.mxu0 0
        %1675 = vmatprep.subr.bf16.mxu0 0
        %1676 = vmatpush1.bf16.msra.mxu0 0
        %1677 = vmatprep.subr.bf16.mxu0 0
        %1678 = vmatpush1.bf16.msra.mxu0 0
        %1679 = vmatprep.subr.bf16.mxu0 0
        %1680 = vmatpush1.bf16.msra.mxu0 %v1664
        %1681 = vmatprep.subr.bf16.mxu0 0
        %1682 = vmatpush1.bf16.msra.mxu0 %v1663
        %1683 = vmatprep.subr.bf16.mxu0 0
        %1684 = vmatpush2.bf16.msra.mxu0 0
        %1685 = vmatprep.subr.bf16.mxu0 0
        %1686 = vmatpush2.bf16.msra.mxu0 0
        %1687 = vmatprep.subr.bf16.mxu0 0
        %1688 = vmatpush2.bf16.msra.mxu0 0
        %1689 = vmatprep.subr.bf16.mxu0 0
        %1690 = vmatpush2.bf16.msra.mxu0 0
        %1691 = vmatprep.subr.bf16.mxu0 0
        %1692 = vmatpush2.bf16.msra.mxu0 0
        %1693 = vmatprep.subr.bf16.mxu0 0
        %1694 = vmatpush2.bf16.msra.mxu0 0
        %1695 = vmatprep.subr.bf16.mxu0 0
        %1696 = vmatpush2.bf16.msra.mxu0 0
        %1697 = vmatprep.subr.bf16.mxu0 0
        %1698 = vmatpush2.bf16.msra.mxu0 0
        %1699 = vmatprep.mubr.bf16.mxu0 0
        %1700 = vmatmul.mubr.bf16.gmra.mxu0 %v802
        %v1701 = vpop.f32.mrf.mxu0
        %v1702 = vadd.f32 0.0, %v1701
        %v1703 = vpop.f32.mrf.mxu0
        %v1704 = vpop.f32.mrf.mxu0
        %v1705 = vadd.f32 0.0, %v1704
        %v1706 = vpop.f32.mrf.mxu0
        %1707 = vmatprep.mubr.bf16.mxu0 0
        %1708 = vmatmul.mubr.bf16.gmra.mxu0 %v805
        %v1709 = vpop.f32.mrf.mxu0
        %v1710 = vadd.f32 0.0, %v1709
        %v1711 = vpop.f32.mrf.mxu0
        %v1712 = vpop.f32.mrf.mxu0
        %v1713 = vadd.f32 0.0, %v1712
        %v1714 = vpop.f32.mrf.mxu0
        %1715 = vmatprep.mubr.bf16.mxu0 0
        %1716 = vmatmul.mubr.bf16.gmra.mxu0 %v808
        %v1717 = vpop.f32.mrf.mxu0
        %v1718 = vadd.f32 0.0, %v1717
        %v1719 = vpop.f32.mrf.mxu0
        %v1720 = vpop.f32.mrf.mxu0
        %v1721 = vadd.f32 0.0, %v1720
        %v1722 = vpop.f32.mrf.mxu0
        %1723 = vmatprep.mubr.bf16.mxu0 0
        %1724 = vmatmul.mubr.bf16.gmra.mxu0 %v811
        %v1725 = vpop.f32.mrf.mxu0
        %v1726 = vadd.f32 0.0, %v1725
        %v1727 = vpop.f32.mrf.mxu0
        %v1728 = vpop.f32.mrf.mxu0
        %v1729 = vadd.f32 0.0, %v1728
        %v1730 = vpop.f32.mrf.mxu0
        %1731 = vdwg.mxu0
        %v1732 = vadd.f32 %v1643, %v1702
        %v1733 = vadd.f32 %v1644, %v1705
        %v1734 = vadd.f32 %v1645, %v1710
        %v1735 = vadd.f32 %v1646, %v1713
        %v1736 = vadd.f32 %v1647, %v1718
        %v1737 = vadd.f32 %v1648, %v1721
        %v1738 = vadd.f32 %v1649, %v1726
        %v1739 = vadd.f32 %v1650, %v1729
        %v1740 = vld [vmem:[%s16] sm:$0x1]
        %v1742 = vlaneseq
        %v1743 = vshrl.u32 %v1742, 7
        %v1744 = vsub.s32 0, %v1743
        %v1745 = vrot.slane %v1740, %v1744
        %1747 = vmatprep.subr.mxu0 0.0
        %1748 = vmatpush1.msra.mxu0 0.0
        %1749 = vmatprep.subr.mxu0 0.0
        %1750 = vmatpush1.msra.mxu0 0.0
        %1751 = vmatprep.subr.mxu0 0.0
        %1752 = vmatpush1.msra.mxu0 0.0
        %1753 = vmatprep.subr.mxu0 0.0
        %1754 = vmatpush1.msra.mxu0 0.0
        %1755 = vmatprep.subr.mxu0 0.0
        %1756 = vmatpush1.msra.mxu0 0.0
        %1757 = vmatprep.subr.mxu0 0.0
        %1758 = vmatpush1.msra.mxu0 0.0
        %1759 = vmatprep.subr.mxu0 0.0
        %1760 = vmatpush1.msra.mxu0 0.0
        %1761 = vmatprep.subr.mxu0 0.0
        %1762 = vmatpush1.msra.mxu0 0.0
        %1763 = vmatprep.subr.mxu0 0.0
        %1764 = vmatpush1.msra.mxu0 %v1739
        %1765 = vmatprep.subr.mxu0 0.0
        %1766 = vmatpush1.msra.mxu0 %v1738
        %1767 = vmatprep.subr.mxu0 0.0
        %1768 = vmatpush1.msra.mxu0 %v1737
        %1769 = vmatprep.subr.mxu0 0.0
        %1770 = vmatpush1.msra.mxu0 %v1736
        %1771 = vmatprep.subr.mxu0 0.0
        %1772 = vmatpush1.msra.mxu0 %v1735
        %1773 = vmatprep.subr.mxu0 0.0
        %1774 = vmatpush1.msra.mxu0 %v1734
        %1775 = vmatprep.subr.mxu0 0.0
        %1776 = vmatpush1.msra.mxu0 %v1733
        %1777 = vmatprep.subr.mxu0 0.0
        %1778 = vmatpush1.msra.mxu0 %v1732
        %1779 = vmatprep.subr.mxu0 0.0
        %1780 = vmatpush2.msra.mxu0 0.0
        %1781 = vmatprep.subr.mxu0 0.0
        %1782 = vmatpush2.msra.mxu0 0.0
        %1783 = vmatprep.subr.mxu0 0.0
        %1784 = vmatpush2.msra.mxu0 0.0
        %1785 = vmatprep.subr.mxu0 0.0
        %1786 = vmatpush2.msra.mxu0 0.0
        %1787 = vmatprep.subr.mxu0 0.0
        %1788 = vmatpush2.msra.mxu0 0.0
        %1789 = vmatprep.subr.mxu0 0.0
        %1790 = vmatpush2.msra.mxu0 0.0
        %1791 = vmatprep.subr.mxu0 0.0
        %1792 = vmatpush2.msra.mxu0 0.0
        %1793 = vmatprep.subr.mxu0 0.0
        %1794 = vmatpush2.msra.mxu0 0.0
        %1795 = vmatprep.subr.mxu0 0.0
        %1796 = vmatpush2.msra.mxu0 0.0
        %1797 = vmatprep.subr.mxu0 0.0
        %1798 = vmatpush2.msra.mxu0 0.0
        %1799 = vmatprep.subr.mxu0 0.0
        %1800 = vmatpush2.msra.mxu0 0.0
        %1801 = vmatprep.subr.mxu0 0.0
        %1802 = vmatpush2.msra.mxu0 0.0
        %1803 = vmatprep.subr.mxu0 0.0
        %1804 = vmatpush2.msra.mxu0 0.0
        %1805 = vmatprep.subr.mxu0 0.0
        %1806 = vmatpush2.msra.mxu0 0.0
        %1807 = vmatprep.subr.mxu0 0.0
        %1808 = vmatpush2.msra.mxu0 0.0
        %1809 = vmatprep.subr.mxu0 0.0
        %1810 = vmatpush2.msra.mxu0 0.0
        %1811 = vmatprep.mubr.bf16.mxu0 0
        %1812 = vmatmul.mubr.bf16.gmra.mxu0 %v1116
        %v1813 = vpop.f32.mrf.mxu0
        %v1814 = vadd.f32 %v1745, %v1813
        %v1815 = vpop.f32.mrf.mxu0
        %v1816 = vpop.f32.mrf.mxu0
        %v1817 = vadd.f32 %v1745, %v1816
        %v1818 = vpop.f32.mrf.mxu0
        %1819 = vmatprep.mubr.bf16.mxu0 0
        %1820 = vmatmul.mubr.bf16.gmra.mxu0 %v1119
        %v1821 = vpop.f32.mrf.mxu0
        %v1822 = vadd.f32 %v1745, %v1821
        %v1823 = vpop.f32.mrf.mxu0
        %v1824 = vpop.f32.mrf.mxu0
        %v1825 = vadd.f32 %v1745, %v1824
        %v1826 = vpop.f32.mrf.mxu0
        %1827 = vmatprep.mubr.bf16.mxu0 0
        %1828 = vmatmul.mubr.bf16.gmra.mxu0 %v1122
        %v1829 = vpop.f32.mrf.mxu0
        %v1830 = vadd.f32 %v1745, %v1829
        %v1831 = vpop.f32.mrf.mxu0
        %v1832 = vpop.f32.mrf.mxu0
        %v1833 = vadd.f32 %v1745, %v1832
        %v1834 = vpop.f32.mrf.mxu0
        %1835 = vmatprep.mubr.bf16.mxu0 0
        %1836 = vmatmul.mubr.bf16.gmra.mxu0 %v1125
        %v1837 = vpop.f32.mrf.mxu0
        %v1838 = vadd.f32 %v1745, %v1837
        %v1839 = vpop.f32.mrf.mxu0
        %v1840 = vpop.f32.mrf.mxu0
        %v1841 = vadd.f32 %v1745, %v1840
        %v1842 = vpop.f32.mrf.mxu0
        %1843 = vdwg.mxu0
        %v1844 = vxor.u32 %v1814, 2147483648
        %v1845 = vxor.u32 %v1817, 2147483648
        %v1846 = vxor.u32 %v1822, 2147483648
        %v1847 = vxor.u32 %v1825, 2147483648
        %v1848 = vxor.u32 %v1830, 2147483648
        %v1849 = vxor.u32 %v1833, 2147483648
        %v1850 = vxor.u32 %v1838, 2147483648
        %v1851 = vxor.u32 %v1841, 2147483648
        %v1852 = vmul.f32 %v1844, 1.442695
        %v1853 = vpow.pop %v1852
        %v1854 = vmul.f32 %v1845, 1.442695
        %v1855 = vpow.pop %v1854
        %v1856 = vmul.f32 %v1846, 1.442695
        %v1857 = vpow.pop %v1856
        %v1858 = vmul.f32 %v1847, 1.442695
        %v1859 = vpow.pop %v1858
        %v1860 = vmul.f32 %v1848, 1.442695
        %v1861 = vpow.pop %v1860
        %v1862 = vmul.f32 %v1849, 1.442695
        %v1863 = vpow.pop %v1862
        %v1864 = vmul.f32 %v1850, 1.442695
        %v1865 = vpow.pop %v1864
        %v1866 = vmul.f32 %v1851, 1.442695
        %v1867 = vpow.pop %v1866
        %v1868 = vadd.f32 %v1853, 1.0
        %v1869 = vadd.f32 %v1855, 1.0
        %v1870 = vadd.f32 %v1857, 1.0
        %v1871 = vadd.f32 %v1859, 1.0
        %v1872 = vadd.f32 %v1861, 1.0
        %v1873 = vadd.f32 %v1863, 1.0
        %v1874 = vadd.f32 %v1865, 1.0
        %v1875 = vadd.f32 %v1867, 1.0
        %v1876 = vrcp.pop %v1868
        %v1877 = vmul.f32 1.0, %v1876
        %v1878 = vrcp.pop %v1869
        %v1879 = vmul.f32 1.0, %v1878
        %v1880 = vrcp.pop %v1870
        %v1881 = vmul.f32 1.0, %v1880
        %v1882 = vrcp.pop %v1871
        %v1883 = vmul.f32 1.0, %v1882
        %v1884 = vrcp.pop %v1872
        %v1885 = vmul.f32 1.0, %v1884
        %v1886 = vrcp.pop %v1873
        %v1887 = vmul.f32 1.0, %v1886
        %v1888 = vrcp.pop %v1874
        %v1889 = vmul.f32 1.0, %v1888
        %v1890 = vrcp.pop %v1875
        %v1891 = vmul.f32 1.0, %v1890
        %1900 = vrot.lane.b32.xlu0 %v765, 32
        %v1901 = vpop.permute.xlu0 %1900
        %1902 = vrot.lane.b32.xlu0 %v766, 32
        %v1903 = vpop.permute.xlu0 %1902
        %1904 = vrot.lane.b32.xlu0 %v767, 32
        %v1905 = vpop.permute.xlu0 %1904
        %1906 = vrot.lane.b32.xlu0 %v768, 32
        %v1907 = vpop.permute.xlu0 %1906
        %1908 = vrot.lane.b32.xlu0 %v769, 32
        %v1909 = vpop.permute.xlu0 %1908
        %1910 = vrot.lane.b32.xlu0 %v770, 32
        %v1911 = vpop.permute.xlu0 %1910
        %1912 = vrot.lane.b32.xlu0 %v771, 32
        %v1913 = vpop.permute.xlu0 %1912
        %1914 = vrot.lane.b32.xlu0 %v772, 32
        %v1915 = vpop.permute.xlu0 %1914
        %v1924 = vmul.f32 %v1877, %v1901
        %v1925 = vmul.f32 %v1879, %v1903
        %v1926 = vmul.f32 %v1881, %v1905
        %v1927 = vmul.f32 %v1883, %v1907
        %v1928 = vmul.f32 %v1885, %v1909
        %v1929 = vmul.f32 %v1887, %v1911
        %v1930 = vmul.f32 %v1889, %v1913
        %v1931 = vmul.f32 %v1891, %v1915
        %v1932 = vld [vmem:[#allocation15] sm:$0xf]
        %v1933 = vld [vmem:[#allocation15 + $0x4] sm:$0xf]
        %v1934 = vld [vmem:[#allocation15 + $0x8] sm:$0xf]
        %v1935 = vld [vmem:[#allocation15 + $0xc] sm:$0xf]
        %v1936 = vpack.c.bf16 %v1925, %v1924
        %v1937 = vpack.c.bf16 %v1927, %v1926
        %v1938 = vpack.c.bf16 %v1929, %v1928
        %v1939 = vpack.c.bf16 %v1931, %v1930
        %1944 = vrot.lane.b32.xlu0 %v1936, 96
        %v1945 = vpop.permute.xlu0 %1944
        %1946 = vrot.lane.b32.xlu0 %v1937, 96
        %v1947 = vpop.permute.xlu0 %1946
        %1948 = vrot.lane.b32.xlu0 %v1938, 96
        %v1949 = vpop.permute.xlu0 %1948
        %1950 = vrot.lane.b32.xlu0 %v1939, 96
        %v1951 = vpop.permute.xlu0 %1950
        %v1956 = vunpack.c.l.b16 %v1932
        %v1957 = vunpack.c.l.b16 %v1933
        %v1958 = vunpack.c.l.b16 %v1934
        %v1959 = vunpack.c.l.b16 %v1935
        %v1960 = vpack.c.b16 %v1957, %v1956
        %v1961 = vpack.c.b16 %v1959, %v1958
        %v1965 = vsel %vm800, %v1945, 0
        %v1968 = vsel %vm800, %v1947, 0
        %v1971 = vsel %vm800, %v1949, 0
        %v1974 = vsel %vm800, %v1951, 0
        %1976 = vmatprep.subr.bf16.mxu0 0
        %1977 = vmatpush1.bf16.msra.mxu0 0
        %1978 = vmatprep.subr.bf16.mxu0 0
        %1979 = vmatpush1.bf16.msra.mxu0 0
        %1980 = vmatprep.subr.bf16.mxu0 0
        %1981 = vmatpush1.bf16.msra.mxu0 0
        %1982 = vmatprep.subr.bf16.mxu0 0
        %1983 = vmatpush1.bf16.msra.mxu0 0
        %1984 = vmatprep.subr.bf16.mxu0 0
        %1985 = vmatpush1.bf16.msra.mxu0 0
        %1986 = vmatprep.subr.bf16.mxu0 0
        %1987 = vmatpush1.bf16.msra.mxu0 0
        %1988 = vmatprep.subr.bf16.mxu0 0
        %1989 = vmatpush1.bf16.msra.mxu0 %v1961
        %1990 = vmatprep.subr.bf16.mxu0 0
        %1991 = vmatpush1.bf16.msra.mxu0 %v1960
        %1992 = vmatprep.subr.bf16.mxu0 0
        %1993 = vmatpush2.bf16.msra.mxu0 0
        %1994 = vmatprep.subr.bf16.mxu0 0
        %1995 = vmatpush2.bf16.msra.mxu0 0
        %1996 = vmatprep.subr.bf16.mxu0 0
        %1997 = vmatpush2.bf16.msra.mxu0 0
        %1998 = vmatprep.subr.bf16.mxu0 0
        %1999 = vmatpush2.bf16.msra.mxu0 0
        %2000 = vmatprep.subr.bf16.mxu0 0
        %2001 = vmatpush2.bf16.msra.mxu0 0
        %2002 = vmatprep.subr.bf16.mxu0 0
        %2003 = vmatpush2.bf16.msra.mxu0 0
        %2004 = vmatprep.subr.bf16.mxu0 0
        %2005 = vmatpush2.bf16.msra.mxu0 0
        %2006 = vmatprep.subr.bf16.mxu0 0
        %2007 = vmatpush2.bf16.msra.mxu0 0
        %2008 = vmatprep.mubr.bf16.mxu0 0
        %2009 = vmatmul.mubr.bf16.gmra.mxu0 %v1965
        %v2010 = vpop.f32.mrf.mxu0
        %v2011 = vadd.f32 0.0, %v2010
        %v2012 = vpop.f32.mrf.mxu0
        %v2013 = vpop.f32.mrf.mxu0
        %v2014 = vadd.f32 0.0, %v2013
        %v2015 = vpop.f32.mrf.mxu0
        %2016 = vmatprep.mubr.bf16.mxu0 0
        %2017 = vmatmul.mubr.bf16.gmra.mxu0 %v1968
        %v2018 = vpop.f32.mrf.mxu0
        %v2019 = vadd.f32 0.0, %v2018
        %v2020 = vpop.f32.mrf.mxu0
        %v2021 = vpop.f32.mrf.mxu0
        %v2022 = vadd.f32 0.0, %v2021
        %v2023 = vpop.f32.mrf.mxu0
        %2024 = vmatprep.mubr.bf16.mxu0 0
        %2025 = vmatmul.mubr.bf16.gmra.mxu0 %v1971
        %v2026 = vpop.f32.mrf.mxu0
        %v2027 = vadd.f32 0.0, %v2026
        %v2028 = vpop.f32.mrf.mxu0
        %v2029 = vpop.f32.mrf.mxu0
        %v2030 = vadd.f32 0.0, %v2029
        %v2031 = vpop.f32.mrf.mxu0
        %2032 = vmatprep.mubr.bf16.mxu0 0
        %2033 = vmatmul.mubr.bf16.gmra.mxu0 %v1974
        %v2034 = vpop.f32.mrf.mxu0
        %v2035 = vadd.f32 0.0, %v2034
        %v2036 = vpop.f32.mrf.mxu0
        %v2037 = vpop.f32.mrf.mxu0
        %v2038 = vadd.f32 0.0, %v2037
        %v2039 = vpop.f32.mrf.mxu0
        %2040 = vdwg.mxu0
        %v2041 = vld [vmem:[%s18] sm:$0x1]
        %v2043 = vlaneseq
        %v2044 = vshrl.u32 %v2043, 7
        %v2045 = vsub.s32 0, %v2044
        %v2046 = vrot.slane %v2041, %v2045
        %2048 = vmatprep.subr.mxu0 0.0
        %2049 = vmatpush1.msra.mxu0 0.0
        %2050 = vmatprep.subr.mxu0 0.0
        %2051 = vmatpush1.msra.mxu0 0.0
        %2052 = vmatprep.subr.mxu0 0.0
        %2053 = vmatpush1.msra.mxu0 0.0
        %2054 = vmatprep.subr.mxu0 0.0
        %2055 = vmatpush1.msra.mxu0 0.0
        %2056 = vmatprep.subr.mxu0 0.0
        %2057 = vmatpush1.msra.mxu0 0.0
        %2058 = vmatprep.subr.mxu0 0.0
        %2059 = vmatpush1.msra.mxu0 0.0
        %2060 = vmatprep.subr.mxu0 0.0
        %2061 = vmatpush1.msra.mxu0 0.0
        %2062 = vmatprep.subr.mxu0 0.0
        %2063 = vmatpush1.msra.mxu0 0.0
        %2064 = vmatprep.subr.mxu0 0.0
        %2065 = vmatpush1.msra.mxu0 %v2038
        %2066 = vmatprep.subr.mxu0 0.0
        %2067 = vmatpush1.msra.mxu0 %v2035
        %2068 = vmatprep.subr.mxu0 0.0
        %2069 = vmatpush1.msra.mxu0 %v2030
        %2070 = vmatprep.subr.mxu0 0.0
        %2071 = vmatpush1.msra.mxu0 %v2027
        %2072 = vmatprep.subr.mxu0 0.0
        %2073 = vmatpush1.msra.mxu0 %v2022
        %2074 = vmatprep.subr.mxu0 0.0
        %2075 = vmatpush1.msra.mxu0 %v2019
        %2076 = vmatprep.subr.mxu0 0.0
        %2077 = vmatpush1.msra.mxu0 %v2014
        %2078 = vmatprep.subr.mxu0 0.0
        %2079 = vmatpush1.msra.mxu0 %v2011
        %2080 = vmatprep.subr.mxu0 0.0
        %2081 = vmatpush2.msra.mxu0 0.0
        %2082 = vmatprep.subr.mxu0 0.0
        %2083 = vmatpush2.msra.mxu0 0.0
        %2084 = vmatprep.subr.mxu0 0.0
        %2085 = vmatpush2.msra.mxu0 0.0
        %2086 = vmatprep.subr.mxu0 0.0
        %2087 = vmatpush2.msra.mxu0 0.0
        %2088 = vmatprep.subr.mxu0 0.0
        %2089 = vmatpush2.msra.mxu0 0.0
        %2090 = vmatprep.subr.mxu0 0.0
        %2091 = vmatpush2.msra.mxu0 0.0
        %2092 = vmatprep.subr.mxu0 0.0
        %2093 = vmatpush2.msra.mxu0 0.0
        %2094 = vmatprep.subr.mxu0 0.0
        %2095 = vmatpush2.msra.mxu0 0.0
        %2096 = vmatprep.subr.mxu0 0.0
        %2097 = vmatpush2.msra.mxu0 0.0
        %2098 = vmatprep.subr.mxu0 0.0
        %2099 = vmatpush2.msra.mxu0 0.0
        %2100 = vmatprep.subr.mxu0 0.0
        %2101 = vmatpush2.msra.mxu0 0.0
        %2102 = vmatprep.subr.mxu0 0.0
        %2103 = vmatpush2.msra.mxu0 0.0
        %2104 = vmatprep.subr.mxu0 0.0
        %2105 = vmatpush2.msra.mxu0 0.0
        %2106 = vmatprep.subr.mxu0 0.0
        %2107 = vmatpush2.msra.mxu0 0.0
        %2108 = vmatprep.subr.mxu0 0.0
        %2109 = vmatpush2.msra.mxu0 0.0
        %2110 = vmatprep.subr.mxu0 0.0
        %2111 = vmatpush2.msra.mxu0 0.0
        %2112 = vmatprep.mubr.bf16.mxu0 0
        %2113 = vmatmul.mubr.bf16.gmra.mxu0 %v1116
        %v2114 = vpop.f32.mrf.mxu0
        %v2115 = vadd.f32 %v2046, %v2114
        %v2116 = vpop.f32.mrf.mxu0
        %v2117 = vpop.f32.mrf.mxu0
        %v2118 = vadd.f32 %v2046, %v2117
        %v2119 = vpop.f32.mrf.mxu0
        %2120 = vmatprep.mubr.bf16.mxu0 0
        %2121 = vmatmul.mubr.bf16.gmra.mxu0 %v1119
        %v2122 = vpop.f32.mrf.mxu0
        %v2123 = vadd.f32 %v2046, %v2122
        %v2124 = vpop.f32.mrf.mxu0
        %v2125 = vpop.f32.mrf.mxu0
        %v2126 = vadd.f32 %v2046, %v2125
        %v2127 = vpop.f32.mrf.mxu0
        %2128 = vmatprep.mubr.bf16.mxu0 0
        %2129 = vmatmul.mubr.bf16.gmra.mxu0 %v1122
        %v2130 = vpop.f32.mrf.mxu0
        %v2131 = vadd.f32 %v2046, %v2130
        %v2132 = vpop.f32.mrf.mxu0
        %v2133 = vpop.f32.mrf.mxu0
        %v2134 = vadd.f32 %v2046, %v2133
        %v2135 = vpop.f32.mrf.mxu0
        %2136 = vmatprep.mubr.bf16.mxu0 0
        %2137 = vmatmul.mubr.bf16.gmra.mxu0 %v1125
        %v2138 = vpop.f32.mrf.mxu0
        %v2139 = vadd.f32 %v2046, %v2138
        %v2140 = vpop.f32.mrf.mxu0
        %v2141 = vpop.f32.mrf.mxu0
        %v2142 = vadd.f32 %v2046, %v2141
        %v2143 = vpop.f32.mrf.mxu0
        %2144 = vdwg.mxu0
        %2153 = vrot.lane.b32.xlu0 %v2115, 64
        %v2154 = vpop.permute.xlu0 %2153
        %2155 = vrot.lane.b32.xlu0 %v2118, 64
        %v2156 = vpop.permute.xlu0 %2155
        %2157 = vrot.lane.b32.xlu0 %v2123, 64
        %v2158 = vpop.permute.xlu0 %2157
        %2159 = vrot.lane.b32.xlu0 %v2126, 64
        %v2160 = vpop.permute.xlu0 %2159
        %2161 = vrot.lane.b32.xlu0 %v2131, 64
        %v2162 = vpop.permute.xlu0 %2161
        %2163 = vrot.lane.b32.xlu0 %v2134, 64
        %v2164 = vpop.permute.xlu0 %2163
        %2165 = vrot.lane.b32.xlu0 %v2139, 64
        %v2166 = vpop.permute.xlu0 %2165
        %2167 = vrot.lane.b32.xlu0 %v2142, 64
        %v2168 = vpop.permute.xlu0 %2167
        %v2177 = vadd.f32 %v1814, %v2154
        %v2178 = vadd.f32 %v1817, %v2156
        %v2179 = vadd.f32 %v1822, %v2158
        %v2180 = vadd.f32 %v1825, %v2160
        %v2181 = vadd.f32 %v1830, %v2162
        %v2182 = vadd.f32 %v1833, %v2164
        %v2183 = vadd.f32 %v1838, %v2166
        %v2184 = vadd.f32 %v1841, %v2168
        %v2185 = vtanh.pop %v2177
        %v2186 = vtanh.pop %v2178
        %v2187 = vtanh.pop %v2179
        %v2188 = vtanh.pop %v2180
        %v2189 = vtanh.pop %v2181
        %v2190 = vtanh.pop %v2182
        %v2191 = vtanh.pop %v2183
        %v2192 = vtanh.pop %v2184
        %v2193 = vlaneseq
        %v2194 = vshrl.u32 %v2193, 7
        %v2195 = vsub.s32 0, %v2194
        %v2196 = vrot.slane %v765, %v2195
        %v2197 = vmul.f32 %v1877, %v2196
        %v2198 = vmul.f32 %v1879, %v2196
        %v2199 = vmul.f32 %v1881, %v2196
        %v2200 = vmul.f32 %v1883, %v2196
        %v2201 = vmul.f32 %v1885, %v2196
        %v2202 = vmul.f32 %v1887, %v2196
        %v2203 = vmul.f32 %v1889, %v2196
        %v2204 = vmul.f32 %v1891, %v2196
        %v2205 = vsub.f32 1.0, %v1877
        %v2206 = vsub.f32 1.0, %v1879
        %v2207 = vsub.f32 1.0, %v1881
        %v2208 = vsub.f32 1.0, %v1883
        %v2209 = vsub.f32 1.0, %v1885
        %v2210 = vsub.f32 1.0, %v1887
        %v2211 = vsub.f32 1.0, %v1889
        %v2212 = vsub.f32 1.0, %v1891
        %2221 = vrot.lane.b32.xlu0 %v2185, 64
        %v2222 = vpop.permute.xlu0 %2221
        %2223 = vrot.lane.b32.xlu0 %v2186, 64
        %v2224 = vpop.permute.xlu0 %2223
        %2225 = vrot.lane.b32.xlu0 %v2187, 64
        %v2226 = vpop.permute.xlu0 %2225
        %2227 = vrot.lane.b32.xlu0 %v2188, 64
        %v2228 = vpop.permute.xlu0 %2227
        %2229 = vrot.lane.b32.xlu0 %v2189, 64
        %v2230 = vpop.permute.xlu0 %2229
        %2231 = vrot.lane.b32.xlu0 %v2190, 64
        %v2232 = vpop.permute.xlu0 %2231
        %2233 = vrot.lane.b32.xlu0 %v2191, 64
        %v2234 = vpop.permute.xlu0 %2233
        %2235 = vrot.lane.b32.xlu0 %v2192, 64
        %v2236 = vpop.permute.xlu0 %2235
        %v2245 = vmul.f32 %v2205, %v2222
        %v2246 = vmul.f32 %v2206, %v2224
        %v2247 = vmul.f32 %v2207, %v2226
        %v2248 = vmul.f32 %v2208, %v2228
        %v2249 = vmul.f32 %v2209, %v2230
        %v2250 = vmul.f32 %v2210, %v2232
        %v2251 = vmul.f32 %v2211, %v2234
        %v2252 = vmul.f32 %v2212, %v2236
        %v2253 = vadd.f32 %v2197, %v2245
        %v2254 = vadd.f32 %v2198, %v2246
        %v2255 = vadd.f32 %v2199, %v2247
        %v2256 = vadd.f32 %v2200, %v2248
        %v2257 = vadd.f32 %v2201, %v2249
        %v2258 = vadd.f32 %v2202, %v2250
        %v2259 = vadd.f32 %v2203, %v2251
        %v2260 = vadd.f32 %v2204, %v2252
        %2261 = vst.msk [vmem:[#allocation2] sm:$0xff] %vm800, %v2253
        %2262 = vst.msk [vmem:[#allocation2 + $0x8] sm:$0xff] %vm800, %v2254
        %2263 = vst.msk [vmem:[#allocation2 + $0x10] sm:$0xff] %vm800, %v2255
        %2264 = vst.msk [vmem:[#allocation2 + $0x18] sm:$0xff] %vm800, %v2256
        %2265 = vst.msk [vmem:[#allocation2 + $0x20] sm:$0xff] %vm800, %v2257
        %2266 = vst.msk [vmem:[#allocation2 + $0x28] sm:$0xff] %vm800, %v2258
        %2267 = vst.msk [vmem:[#allocation2 + $0x30] sm:$0xff] %vm800, %v2259
        %2268 = vst.msk [vmem:[#allocation2 + $0x38] sm:$0xff] %vm800, %v2260
        %2269 = vst [vmem:[%s727] sm:$0xff] %v960
        %2270 = vst [vmem:[%s727 + $0x8] sm:$0xff] %v963
        %2271 = vst [vmem:[%s727 + $0x10] sm:$0xff] %v968
        %2272 = vst [vmem:[%s727 + $0x18] sm:$0xff] %v971
        %2273 = vst [vmem:[%s727 + $0x20] sm:$0xff] %v976
        %2274 = vst [vmem:[%s727 + $0x28] sm:$0xff] %v979
        %2275 = vst [vmem:[%s727 + $0x30] sm:$0xff] %v984
        %2276 = vst [vmem:[%s727 + $0x38] sm:$0xff] %v987
        %p2277 = scmp.eq.s32.totalorder %s40, 3
        // Predicated region
        $region133: #{tpu_custom_call.1} parent=95 // pred_check
          %p2278 = pneg %p2277
        $region134: #{tpu_custom_call.1} parent=95 // pred_check_branch
          %2280 = sbr.rel (%p2278) target = $region136
        $region135: #{tpu_custom_call.1} parent=95 // pred_region
          %2281 = vst.msk [vmem:[%s20] sm:$0xff] %vm800, %v2253
          %2282 = vst.msk [vmem:[%s20 + $0x8] sm:$0xff] %vm800, %v2254
          %2283 = vst.msk [vmem:[%s20 + $0x10] sm:$0xff] %vm800, %v2255
          %2284 = vst.msk [vmem:[%s20 + $0x18] sm:$0xff] %vm800, %v2256
          %2285 = vst.msk [vmem:[%s20 + $0x20] sm:$0xff] %vm800, %v2257
          %2286 = vst.msk [vmem:[%s20 + $0x28] sm:$0xff] %vm800, %v2258
          %2287 = vst.msk [vmem:[%s20 + $0x30] sm:$0xff] %vm800, %v2259
          %2288 = vst.msk [vmem:[%s20 + $0x38] sm:$0xff] %vm800, %v2260
        $region136: #{tpu_custom_call.1} parent=95 // pred_fallthru
          _
        %s2289 = sand.u32 %s452, 1
        %s2290 = scalar_lea.sflag [#allocation5], %s2289
        %s2291 = sand.u32 %s452, 1
        %s2292 = smul.addr %s2291, 64
        %s2293 = scalar_lea.vmem [#allocation17], %s2292
        // Predicated region
        $region137: #{tpu_custom_call.1} parent=95 // pred_check
          %p2294 = pneg %p462
        $region138: #{tpu_custom_call.1} parent=95 // pred_check_branch
          %2296 = sbr.rel (%p2294) target = $region140
        $region139: #{tpu_custom_call.1} parent=95 // pred_region
          %s2298 = ssub.s32 1024, 1024
          %2299 = vsyncadd %s2290, %s2298
          %s2300 = smul.addr %s40, 8
          %s2301 = smul.addr %s2300, 128
          %s2302 = scalar_lea.hbm %s19, %s2301
          %s2303 = sshll.u32 %s2293, 4
          %s2304 = int_to_ptr.vmem [resolvable:$true] %s2303
          %2309 = dma.vmem_to_hbm [thread:$0]  %s2304, 1024, %s2302, %s2290, 128, 128, 8
        $region140: #{tpu_custom_call.1} parent=95 // pred_fallthru
          _
        // Predicated region
        $region141: #{tpu_custom_call.1} parent=95 // pred_check
          %p2310 = pneg %p483
        $region142: #{tpu_custom_call.1} parent=95 // pred_check_branch
          %2312 = sbr.rel (%p2310) target = $region144
        $region143: #{tpu_custom_call.1} parent=95 // pred_region
          _
        $region144: #{tpu_custom_call.1} parent=95 // pred_fallthru
          _
        // Predicated region
        $region145: #{tpu_custom_call.1} parent=95 // pred_check
          %p2313 = pneg %p483
        $region146: #{tpu_custom_call.1} parent=95 // pred_check_branch
          %2315 = sbr.rel (%p2313) target = $region148
        $region147: #{tpu_custom_call.1} parent=95 // pred_region
          _
        $region148: #{tpu_custom_call.1} parent=95 // pred_fallthru
          _
      $region96: #{tpu_custom_call.1} parent=5 // pred_fallthru
        _
      %p2316 = scmp.le.s32.totalorder 2, %s35
      // Predicated region
      $region149: #{tpu_custom_call.1} parent=5 // pred_check
        %p2317 = pneg %p2316
      $region150: #{tpu_custom_call.1} parent=5 // pred_check_branch
        %2319 = sbr.rel (%p2317) target = $region152
      $region151: #{tpu_custom_call.1} parent=5 // pred_region
        %s2320 = ssub.s32 %s35, 2
        // Predicated region
        $region153: #{tpu_custom_call.1} parent=151 // pred_check
          %p2321 = pneg %p468
        $region154: #{tpu_custom_call.1} parent=151 // pred_check_branch
          %2323 = sbr.rel (%p2321) target = $region156
        $region155: #{tpu_custom_call.1} parent=151 // pred_region
          %s2324 = sand.u32 %s453, 1
          %s2325 = scalar_lea.sflag [#allocation5], %s2324
          %s2326 = sand.u32 %s453, 1
          %s2327 = smul.addr %s2326, 64
          %s2328 = scalar_lea.vmem [#allocation17], %s2327
          %2329 = dma.done %s2325, 1024
        $region156: #{tpu_custom_call.1} parent=151 // pred_fallthru
          _
      $region152: #{tpu_custom_call.1} parent=5 // pred_fallthru
        _
    $region6: #{tpu_custom_call.1} parent=1 // loop_footer
      %s39 = sadd.s32 1, %s35
    $region7: #{tpu_custom_call.1} parent=1 // loop_footer_branch
      %34 = sbr.rel target = $region3
    $region8: #{tpu_custom_call.1} parent=1 // loop_exit
      _
    %2330 = vsyncpa [#allocation4], 1
    %s2331 = scalar_lea.sflag [#allocation4], 1
    %2332 = vsyncpa %s2331, 1
    %2333 = vsyncpa [#allocation7], 1
    %2334 = vsyncpa [#allocation10], 1
    %2335 = vsyncpa [#allocation13], 1
    %2336 = vsyncpa [#allocation16], 1
    %2337 = vsyncpa [#allocation5], 1
    %s2338 = scalar_lea.sflag [#allocation5], 1
    %2339 = vsyncpa %s2338, 1

</llo_original>
